<compile_context>
chip_gen: v6e
topology: v6e:2x2x1
jax: 0.10.0
libtpu: 0.0.40
codegen_flags: <defaults>
</compile_context>

<pallas_src>
from functools import partial

import jax
import jax.numpy as jnp
from jax.experimental import pallas as pl
from jax.experimental.pallas import tpu as pltpu

F_PAD = 128        # lane-dense feature/class width used inside the kernel
NUM_LAYERS = 3


def fused_gcn_kernel(a_ref, x_ref, w_ref, b_ref, wf_ref, bf_ref, o_ref, h_scratch):
    """One grid step = (layer l, row tile i).

    Layer l in {0,1,2}:  H_{l+1}[tile] = relu((A[tile,:] @ H_l) @ W'_l + b'_l)
      - H_0 = X (resident VMEM input); H_1/H_2 live in the ping-pong scratch.
      - Layer 2 additionally applies the (row-wise) Linear + log_softmax
        epilogue and writes the output row tile.
    """
    l = pl.program_id(0)
    i = pl.program_id(1)
    tm = a_ref.shape[0]
    row0 = pl.multiple_of(i * tm, tm)

    def layer(h_src):
        # Aggregate first at the narrow width: (A @ H) @ W'.
        # bf16 MXU inputs, f32 accumulate; folded-BN bias + ReLU in f32 (VPU).
        ah = jnp.dot(a_ref[...], h_src, preferred_element_type=jnp.float32)
        z = jnp.dot(ah.astype(jnp.bfloat16), w_ref[0],
                    preferred_element_type=jnp.float32) + b_ref[0]
        return jnp.maximum(z, 0.0)

    @pl.when(l == 0)
    def _():
        h_scratch[0, pl.ds(row0, tm), :] = layer(x_ref[...]).astype(jnp.bfloat16)

    @pl.when(l == 1)
    def _():
        h_scratch[1, pl.ds(row0, tm), :] = layer(h_scratch[0]).astype(jnp.bfloat16)

    @pl.when(l == 2)
    def _():
        h3 = layer(h_scratch[1])
        # dropout(p=0.5) -> identity in inference mode.
        z = jnp.dot(h3.astype(jnp.bfloat16), wf_ref[...],
                    preferred_element_type=jnp.float32) + bf_ref[...]
        # log_softmax over the full 128-lane row; padded classes carry a
        # -1e30 bias so they vanish from the reduction.
        m = jnp.max(z, axis=1, keepdims=True)
        s = z - m
        lse = jnp.log(jnp.sum(jnp.exp(s), axis=1, keepdims=True))
        o_ref[...] = s - lse


def normalized_adjacency(edge_index, num_nodes):
    """Dense GCN normalization: A_hat = D^-1/2 (A + I) D^-1/2 (PyG GCNConv default).
    Duplicate edges count with multiplicity; self-loops added only where missing."""
    src, dst = edge_index[0], edge_index[1]
    a = jnp.zeros((num_nodes, num_nodes), jnp.float32)
    a = a.at[dst, src].add(1.0)                        # message flows src -> dst
    idx = jnp.arange(num_nodes)
    diag = jnp.diagonal(a)
    a = a.at[idx, idx].set(jnp.where(diag > 0, diag, 1.0))  # add_remaining_self_loops
    deg = jnp.sum(a, axis=1)
    dinv = jnp.where(deg > 0, jax.lax.rsqrt(deg), 0.0)
    return dinv[:, None] * a * dinv[None, :]


def init_params(key, f_in, num_classes):
    dims = [(f_in, 32), (32, 64), (64, 128)]
    params = {}
    for i, (fi, fo) in enumerate(dims, start=1):
        key, k_w, k_g, k_b = jax.random.split(key, 4)
        scale = (2.0 / (fi + fo)) ** 0.5
        params[f"w{i}"] = scale * jax.random.normal(k_w, (fi, fo), jnp.float32)
        params[f"b{i}"] = jnp.zeros((fo,), jnp.float32)
        params[f"g{i}"] = 1.0 + 0.1 * jax.random.normal(k_g, (fo,), jnp.float32)  # BN gamma
        params[f"be{i}"] = 0.1 * jax.random.normal(k_b, (fo,), jnp.float32)       # BN beta
        params[f"m{i}"] = jnp.zeros((fo,), jnp.float32)                           # running mean
        params[f"v{i}"] = jnp.ones((fo,), jnp.float32)                            # running var
    key, k_fc = jax.random.split(key)
    params["wf"] = (2.0 / (128 + num_classes)) ** 0.5 * jax.random.normal(
        k_fc, (128, num_classes), jnp.float32)
    params["bf"] = jnp.zeros((num_classes,), jnp.float32)
    return params


def _pad2(m, rows, cols, fill=0.0, dtype=jnp.float32):
    """Pad a 2-D array into a (rows, cols) canvas of `dtype` (no f32 temp)."""
    out = jnp.full((rows, cols), fill, dtype)
    return out.at[:m.shape[0], :m.shape[1]].set(m.astype(dtype))


def _fold_bn(params, i, eps=1e-5):
    """Fold eval-mode BN (+ conv bias) into the layer weight/bias."""
    scale = params[f"g{i}"] * jax.lax.rsqrt(params[f"v{i}"] + eps)
    w = params[f"w{i}"] * scale[None, :]
    b = (params[f"b{i}"] - params[f"m{i}"]) * scale + params[f"be{i}"]
    return w, b


@partial(jax.jit, static_argnames=("num_classes", "row_tile"))
def gcn_forward(x, a_hat, params, num_classes, row_tile=128):
    n = x.shape[0]
    npad = max(128, -(-n // 128) * 128)        # pad N to a multiple of 128
    tm = min(row_tile, npad)                   # A / output row-tile height
    assert npad % tm == 0 and tm % 8 == 0
    nt = npad // tm

    # Padded operands built directly in their kernel dtype.
    a_p = _pad2(a_hat, npad, npad, dtype=jnp.bfloat16)       # [NP, NP] bf16
    x_p = _pad2(x, npad, F_PAD, dtype=jnp.bfloat16)          # [NP, 128] bf16

    ws, bs = [], []
    for i in (1, 2, 3):
        w, b = _fold_bn(params, i)
        ws.append(_pad2(w, F_PAD, F_PAD, dtype=jnp.bfloat16))
        bs.append(_pad2(b.reshape(1, -1), 1, F_PAD))
    w_stack = jnp.stack(ws)                                  # [3, 128, 128] bf16
    b_stack = jnp.stack(bs)                                  # [3, 1, 128] f32
    wf = _pad2(params["wf"], F_PAD, F_PAD, dtype=jnp.bfloat16)
    # padded class columns get -1e30 bias -> they vanish under log_softmax (f32!)
    bf = _pad2(params["bf"].reshape(1, -1), 1, F_PAD, fill=-1e30)

    # VMEM budget: 2x A tiles + resident X + ping-pong H scratch + 2x W/b tiles
    # + resident Wf/bf + 2x output tiles, plus headroom; clamp to v7x physical.
    vmem_bytes = (2 * tm * npad * 2
                  + npad * F_PAD * 2
                  + 2 * npad * F_PAD * 2
                  + 2 * (F_PAD * F_PAD * 2 + F_PAD * 4)
                  + F_PAD * F_PAD * 2 + F_PAD * 4
                  + 2 * tm * F_PAD * 4
                  + (2 << 20))
    vmem_bytes = int(min(64 * 1024 * 1024, max(vmem_bytes, 16 * 1024 * 1024)))

    grid_spec = pltpu.PrefetchScalarGridSpec(
        num_scalar_prefetch=0,
        grid=(NUM_LAYERS, nt),                 # layer outermost (sequential dep)
        in_specs=[
            pl.BlockSpec((tm, npad), lambda l, i: (i, 0)),            # A row tile
            pl.BlockSpec((npad, F_PAD), lambda l, i: (0, 0)),         # X (resident)
            pl.BlockSpec((1, F_PAD, F_PAD), lambda l, i: (l, 0, 0)),  # W'_l
            pl.BlockSpec((1, 1, F_PAD), lambda l, i: (l, 0, 0)),      # b'_l
            pl.BlockSpec((F_PAD, F_PAD), lambda l, i: (0, 0)),        # Wf (resident)
            pl.BlockSpec((1, F_PAD), lambda l, i: (0, 0)),            # bf (resident)
        ],
        out_specs=pl.BlockSpec((tm, F_PAD), lambda l, i: (i, 0)),
        scratch_shapes=[pltpu.VMEM((2, npad, F_PAD), jnp.bfloat16)],  # H ping-pong
    )

    out = pl.pallas_call(
        fused_gcn_kernel,
        out_shape=jax.ShapeDtypeStruct((npad, F_PAD), jnp.float32),
        grid_spec=grid_spec,
        compiler_params=pltpu.CompilerParams(
            # Row axis must stay sequential: H^(l) lives in per-core VMEM scratch.
            dimension_semantics=("arbitrary", "arbitrary"),
            vmem_limit_bytes=vmem_bytes,
        ),
    )(a_p, x_p, w_stack, b_stack, wf, bf)

    return out[:n, :num_classes]


def gcn_reference(x, a_hat, params, num_classes):
    """Pure-JAX f32 reference (eval-mode semantics) for validation."""
    h = x
    for i in (1, 2, 3):
        h = a_hat @ (h @ params[f"w{i}"]) + params[f"b{i}"]
        inv = jax.lax.rsqrt(params[f"v{i}"] + 1e-5)
        h = (h - params[f"m{i}"]) * inv * params[f"g{i}"] + params[f"be{i}"]
        h = jnp.maximum(h, 0.0)
    z = h @ params["wf"] + params["bf"]
    return jax.nn.log_softmax(z, axis=1)


if __name__ == "__main__":
    key = jax.random.PRNGKey(0)
    # N=200 pads to NP=256 so the row-tile grid (3 layers x 2 tiles) is exercised.
    N, F_IN, NUM_CLASSES, NUM_EDGES = 200, 4, 8, 800

    key, k_x, k_e, k_p = jax.random.split(key, 4)
    x = jax.random.normal(k_x, (N, F_IN), jnp.float32)
    edge_index = jax.random.randint(k_e, (2, NUM_EDGES), 0, N, jnp.int32)

    a_hat = normalized_adjacency(edge_index, N)
    params = init_params(k_p, F_IN, NUM_CLASSES)

    out = gcn_forward(x, a_hat, params, num_classes=NUM_CLASSES)
    out = jax.block_until_ready(out)

    assert out.shape == (N, NUM_CLASSES) and out.dtype == jnp.float32
    assert bool(jnp.all(jnp.isfinite(out)))
    # rows of log_softmax must exp-sum to 1 (padded classes contribute ~0)
    assert bool(jnp.allclose(jnp.sum(jnp.exp(out), axis=1), 1.0, atol=1e-3))
    # match f32 reference within bf16-matmul tolerance
    ref = gcn_reference(x, a_hat, params, NUM_CLASSES)
    assert bool(jnp.allclose(out, ref, atol=2e-1))
    print("KERNEL_OK")
</pallas_src>

<mosaic_0001>
module attributes {stable_mosaic.version = 11 : i64} {
  func.func @fused_gcn_kernel(%arg0: i32, %arg1: i32, %arg2: memref<128x256xbf16, #tpu.memory_space<vmem>>, %arg3: memref<256x128xbf16, #tpu.memory_space<vmem>>, %arg4: memref<1x128x128xbf16, #tpu.memory_space<vmem>>, %arg5: memref<1x1x128xf32, #tpu.memory_space<vmem>>, %arg6: memref<128x128xbf16, #tpu.memory_space<vmem>>, %arg7: memref<1x128xf32, #tpu.memory_space<vmem>>, %arg8: memref<128x128xf32, #tpu.memory_space<vmem>>, %arg9: memref<2x256x128xbf16, #tpu.memory_space<vmem>>) attributes {dimension_semantics = [#tpu.dimension_semantics<arbitrary>, #tpu.dimension_semantics<arbitrary>], iteration_bounds = array<i64: 3, 2>, scalar_prefetch = 0 : i64, scratch_operands = 1 : i64, tpu.core_type = #tpu.core_type<tc>, window_params = [{transform_indices = @transform_0, window_bounds = array<i64: 128, 256>}, {pipeline_mode = #tpu.pipeline_mode<synchronous>, transform_indices = @transform_1, window_bounds = array<i64: 256, 128>}, {transform_indices = @transform_2, window_bounds = array<i64: 1, 128, 128>}, {transform_indices = @transform_3, window_bounds = array<i64: 1, 1, 128>}, {pipeline_mode = #tpu.pipeline_mode<synchronous>, transform_indices = @transform_4, window_bounds = array<i64: 128, 128>}, {pipeline_mode = #tpu.pipeline_mode<synchronous>, transform_indices = @transform_5, window_bounds = array<i64: 1, 128>}, {transform_indices = @transform_6, window_bounds = array<i64: 128, 128>}]} {
    %c128_i32 = arith.constant 128 : i32
    %0 = arith.muli %arg1, %c128_i32 : i32
    %1 = tpu.assume_multiple %0, 128 : i32
    %c0_i32 = arith.constant 0 : i32
    %2 = arith.cmpi eq, %arg0, %c0_i32 : i32
    %3 = arith.extui %2 : i1 to i32
    %c0_i32_0 = arith.constant 0 : i32
    %4 = arith.cmpi ne, %3, %c0_i32_0 : i32
    scf.if %4 {
      %c0 = arith.constant 0 : index
      %c0_3 = arith.constant 0 : index
      %11 = vector.load %arg3[%c0, %c0_3] : memref<256x128xbf16, #tpu.memory_space<vmem>>, vector<256x128xbf16>
      %c0_4 = arith.constant 0 : index
      %c0_5 = arith.constant 0 : index
      %12 = vector.load %arg2[%c0_4, %c0_5] : memref<128x256xbf16, #tpu.memory_space<vmem>>, vector<128x256xbf16>
      %cst = arith.constant dense<0.000000e+00> : vector<128x128xf32>
      %13 = tpu.matmul %12, %11, %cst {dimension_numbers = #tpu.dot_dimension_numbers<[1], [0], [0], [1], [0, 0, 1, 1], [], []>} : vector<128x256xbf16>, vector<256x128xbf16>, vector<128x128xf32> -> vector<128x128xf32>
      %14 = arith.truncf %13 : vector<128x128xf32> to vector<128x128xbf16>
      %c0_6 = arith.constant 0 : index
      %c0_7 = arith.constant 0 : index
      %c0_8 = arith.constant 0 : index
      %15 = vector.load %arg4[%c0_6, %c0_7, %c0_8] : memref<1x128x128xbf16, #tpu.memory_space<vmem>>, vector<1x128x128xbf16>
      %16 = vector.shape_cast %15 : vector<1x128x128xbf16> to vector<128x128xbf16>
      %cst_9 = arith.constant dense<0.000000e+00> : vector<128x128xf32>
      %17 = tpu.matmul %14, %16, %cst_9 {dimension_numbers = #tpu.dot_dimension_numbers<[1], [0], [0], [1], [0, 0, 1, 1], [], []>} : vector<128x128xbf16>, vector<128x128xbf16>, vector<128x128xf32> -> vector<128x128xf32>
      %c0_10 = arith.constant 0 : index
      %c0_11 = arith.constant 0 : index
      %c0_12 = arith.constant 0 : index
      %18 = vector.load %arg5[%c0_10, %c0_11, %c0_12] : memref<1x1x128xf32, #tpu.memory_space<vmem>>, vector<1x1x128xf32>
      %19 = vector.shape_cast %18 : vector<1x1x128xf32> to vector<1x128xf32>
      %20 = vector.broadcast %19 : vector<1x128xf32> to vector<128x128xf32>
      %21 = arith.addf %17, %20 : vector<128x128xf32>
      %cst_13 = arith.constant 0.000000e+00 : f32
      %22 = vector.broadcast %cst_13 : f32 to vector<128x128xf32>
      %23 = arith.maximumf %21, %22 : vector<128x128xf32>
      %24 = arith.truncf %23 : vector<128x128xf32> to vector<128x128xbf16>
      %c0_14 = arith.constant 0 : index
      %25 = arith.index_cast %1 : i32 to index
      %c0_15 = arith.constant 0 : index
      %26 = vector.load %arg9[%c0_14, %25, %c0_15] : memref<2x256x128xbf16, #tpu.memory_space<vmem>>, vector<1x128x128xbf16>
      %27 = vector.shape_cast %26 : vector<1x128x128xbf16> to vector<128x128xbf16>
      %28 = vector.shape_cast %24 : vector<128x128xbf16> to vector<1x128x128xbf16>
      tpu.vector_store %arg9[%c0_14, %25, %c0_15], %28 {strides = array<i32>} : memref<2x256x128xbf16, #tpu.memory_space<vmem>>, vector<1x128x128xbf16>,
    } else {
    }
    %c1_i32 = arith.constant 1 : i32
    %5 = arith.cmpi eq, %arg0, %c1_i32 : i32
    %6 = arith.extui %5 : i1 to i32
    %c0_i32_1 = arith.constant 0 : i32
    %7 = arith.cmpi ne, %6, %c0_i32_1 : i32
    scf.if %7 {
      %c0 = arith.constant 0 : index
      %c0_3 = arith.constant 0 : index
      %c0_4 = arith.constant 0 : index
      %11 = vector.load %arg9[%c0, %c0_3, %c0_4] : memref<2x256x128xbf16, #tpu.memory_space<vmem>>, vector<1x256x128xbf16>
      %12 = vector.shape_cast %11 : vector<1x256x128xbf16> to vector<256x128xbf16>
      %c0_5 = arith.constant 0 : index
      %c0_6 = arith.constant 0 : index
      %13 = vector.load %arg2[%c0_5, %c0_6] : memref<128x256xbf16, #tpu.memory_space<vmem>>, vector<128x256xbf16>
      %cst = arith.constant dense<0.000000e+00> : vector<128x128xf32>
      %14 = tpu.matmul %13, %12, %cst {dimension_numbers = #tpu.dot_dimension_numbers<[1], [0], [0], [1], [0, 0, 1, 1], [], []>} : vector<128x256xbf16>, vector<256x128xbf16>, vector<128x128xf32> -> vector<128x128xf32>
      %15 = arith.truncf %14 : vector<128x128xf32> to vector<128x128xbf16>
      %c0_7 = arith.constant 0 : index
      %c0_8 = arith.constant 0 : index
      %c0_9 = arith.constant 0 : index
      %16 = vector.load %arg4[%c0_7, %c0_8, %c0_9] : memref<1x128x128xbf16, #tpu.memory_space<vmem>>, vector<1x128x128xbf16>
      %17 = vector.shape_cast %16 : vector<1x128x128xbf16> to vector<128x128xbf16>
      %cst_10 = arith.constant dense<0.000000e+00> : vector<128x128xf32>
      %18 = tpu.matmul %15, %17, %cst_10 {dimension_numbers = #tpu.dot_dimension_numbers<[1], [0], [0], [1], [0, 0, 1, 1], [], []>} : vector<128x128xbf16>, vector<128x128xbf16>, vector<128x128xf32> -> vector<128x128xf32>
      %c0_11 = arith.constant 0 : index
      %c0_12 = arith.constant 0 : index
      %c0_13 = arith.constant 0 : index
      %19 = vector.load %arg5[%c0_11, %c0_12, %c0_13] : memref<1x1x128xf32, #tpu.memory_space<vmem>>, vector<1x1x128xf32>
      %20 = vector.shape_cast %19 : vector<1x1x128xf32> to vector<1x128xf32>
      %21 = vector.broadcast %20 : vector<1x128xf32> to vector<128x128xf32>
      %22 = arith.addf %18, %21 : vector<128x128xf32>
      %cst_14 = arith.constant 0.000000e+00 : f32
      %23 = vector.broadcast %cst_14 : f32 to vector<128x128xf32>
      %24 = arith.maximumf %22, %23 : vector<128x128xf32>
      %25 = arith.truncf %24 : vector<128x128xf32> to vector<128x128xbf16>
      %c1 = arith.constant 1 : index
      %26 = arith.index_cast %1 : i32 to index
      %c0_15 = arith.constant 0 : index
      %27 = vector.load %arg9[%c1, %26, %c0_15] : memref<2x256x128xbf16, #tpu.memory_space<vmem>>, vector<1x128x128xbf16>
      %28 = vector.shape_cast %27 : vector<1x128x128xbf16> to vector<128x128xbf16>
      %29 = vector.shape_cast %25 : vector<128x128xbf16> to vector<1x128x128xbf16>
      tpu.vector_store %arg9[%c1, %26, %c0_15], %29 {strides = array<i32>} : memref<2x256x128xbf16, #tpu.memory_space<vmem>>, vector<1x128x128xbf16>,
    } else {
    }
    %c2_i32 = arith.constant 2 : i32
    %8 = arith.cmpi eq, %arg0, %c2_i32 : i32
    %9 = arith.extui %8 : i1 to i32
    %c0_i32_2 = arith.constant 0 : i32
    %10 = arith.cmpi ne, %9, %c0_i32_2 : i32
    scf.if %10 {
      %c1 = arith.constant 1 : index
      %c0 = arith.constant 0 : index
      %c0_3 = arith.constant 0 : index
      %11 = vector.load %arg9[%c1, %c0, %c0_3] : memref<2x256x128xbf16, #tpu.memory_space<vmem>>, vector<1x256x128xbf16>
      %12 = vector.shape_cast %11 : vector<1x256x128xbf16> to vector<256x128xbf16>
      %c0_4 = arith.constant 0 : index
      %c0_5 = arith.constant 0 : index
      %13 = vector.load %arg2[%c0_4, %c0_5] : memref<128x256xbf16, #tpu.memory_space<vmem>>, vector<128x256xbf16>
      %cst = arith.constant dense<0.000000e+00> : vector<128x128xf32>
      %14 = tpu.matmul %13, %12, %cst {dimension_numbers = #tpu.dot_dimension_numbers<[1], [0], [0], [1], [0, 0, 1, 1], [], []>} : vector<128x256xbf16>, vector<256x128xbf16>, vector<128x128xf32> -> vector<128x128xf32>
      %15 = arith.truncf %14 : vector<128x128xf32> to vector<128x128xbf16>
      %c0_6 = arith.constant 0 : index
      %c0_7 = arith.constant 0 : index
      %c0_8 = arith.constant 0 : index
      %16 = vector.load %arg4[%c0_6, %c0_7, %c0_8] : memref<1x128x128xbf16, #tpu.memory_space<vmem>>, vector<1x128x128xbf16>
      %17 = vector.shape_cast %16 : vector<1x128x128xbf16> to vector<128x128xbf16>
      %cst_9 = arith.constant dense<0.000000e+00> : vector<128x128xf32>
      %18 = tpu.matmul %15, %17, %cst_9 {dimension_numbers = #tpu.dot_dimension_numbers<[1], [0], [0], [1], [0, 0, 1, 1], [], []>} : vector<128x128xbf16>, vector<128x128xbf16>, vector<128x128xf32> -> vector<128x128xf32>
      %c0_10 = arith.constant 0 : index
      %c0_11 = arith.constant 0 : index
      %c0_12 = arith.constant 0 : index
      %19 = vector.load %arg5[%c0_10, %c0_11, %c0_12] : memref<1x1x128xf32, #tpu.memory_space<vmem>>, vector<1x1x128xf32>
      %20 = vector.shape_cast %19 : vector<1x1x128xf32> to vector<1x128xf32>
      %21 = vector.broadcast %20 : vector<1x128xf32> to vector<128x128xf32>
      %22 = arith.addf %18, %21 : vector<128x128xf32>
      %cst_13 = arith.constant 0.000000e+00 : f32
      %23 = vector.broadcast %cst_13 : f32 to vector<128x128xf32>
      %24 = arith.maximumf %22, %23 : vector<128x128xf32>
      %25 = arith.truncf %24 : vector<128x128xf32> to vector<128x128xbf16>
      %c0_14 = arith.constant 0 : index
      %c0_15 = arith.constant 0 : index
      %26 = vector.load %arg6[%c0_14, %c0_15] : memref<128x128xbf16, #tpu.memory_space<vmem>>, vector<128x128xbf16>
      %cst_16 = arith.constant dense<0.000000e+00> : vector<128x128xf32>
      %27 = tpu.matmul %25, %26, %cst_16 {dimension_numbers = #tpu.dot_dimension_numbers<[1], [0], [0], [1], [0, 0, 1, 1], [], []>} : vector<128x128xbf16>, vector<128x128xbf16>, vector<128x128xf32> -> vector<128x128xf32>
      %c0_17 = arith.constant 0 : index
      %c0_18 = arith.constant 0 : index
      %28 = vector.load %arg7[%c0_17, %c0_18] : memref<1x128xf32, #tpu.memory_space<vmem>>, vector<1x128xf32>
      %29 = vector.broadcast %28 : vector<1x128xf32> to vector<128x128xf32>
      %30 = arith.addf %27, %29 : vector<128x128xf32>
      %cst_19 = arith.constant dense<0xFF800000> : vector<128xf32>
      %31 = vector.multi_reduction <maximumf>, %30, %cst_19 [1] : vector<128x128xf32> to vector<128xf32>
      %32 = vector.shape_cast %31 : vector<128xf32> to vector<128x1xf32>
      %33 = vector.broadcast %32 : vector<128x1xf32> to vector<128x128xf32>
      %34 = arith.subf %30, %33 : vector<128x128xf32>
      %35 = math.exp %34 : vector<128x128xf32>
      %cst_20 = arith.constant dense<0.000000e+00> : vector<128xf32>
      %36 = vector.multi_reduction <add>, %35, %cst_20 [1] : vector<128x128xf32> to vector<128xf32>
      %37 = vector.shape_cast %36 : vector<128xf32> to vector<128x1xf32>
      %38 = math.log %37 : vector<128x1xf32>
      %39 = vector.broadcast %38 : vector<128x1xf32> to vector<128x128xf32>
      %40 = arith.subf %34, %39 : vector<128x128xf32>
      %c0_21 = arith.constant 0 : index
      %c0_22 = arith.constant 0 : index
      %41 = vector.load %arg8[%c0_21, %c0_22] : memref<128x128xf32, #tpu.memory_space<vmem>>, vector<128x128xf32>
      tpu.vector_store %arg8[%c0_21, %c0_22], %40 {strides = array<i32>} : memref<128x128xf32, #tpu.memory_space<vmem>>, vector<128x128xf32>,
    } else {
    }
    return
  }
  func.func @transform_0(%arg0: i32, %arg1: i32) -> (i32, i32) {
    %c0_i32 = arith.constant 0 : i32
    %c0_i32_0 = arith.constant 0 : i32
    return %arg1, %c0_i32 : i32, i32
  }
  func.func @transform_1(%arg0: i32, %arg1: i32) -> (i32, i32) {
    %c0_i32 = arith.constant 0 : i32
    %c0_i32_0 = arith.constant 0 : i32
    %c0_i32_1 = arith.constant 0 : i32
    return %c0_i32, %c0_i32_0 : i32, i32
  }
  func.func @transform_2(%arg0: i32, %arg1: i32) -> (i32, i32, i32) {
    %c0_i32 = arith.constant 0 : i32
    %c0_i32_0 = arith.constant 0 : i32
    %c0_i32_1 = arith.constant 0 : i32
    return %arg0, %c0_i32, %c0_i32_0 : i32, i32, i32
  }
  func.func @transform_3(%arg0: i32, %arg1: i32) -> (i32, i32, i32) {
    %c0_i32 = arith.constant 0 : i32
    %c0_i32_0 = arith.constant 0 : i32
    %c0_i32_1 = arith.constant 0 : i32
    return %arg0, %c0_i32, %c0_i32_0 : i32, i32, i32
  }
  func.func @transform_4(%arg0: i32, %arg1: i32) -> (i32, i32) {
    %c0_i32 = arith.constant 0 : i32
    %c0_i32_0 = arith.constant 0 : i32
    %c0_i32_1 = arith.constant 0 : i32
    return %c0_i32, %c0_i32_0 : i32, i32
  }
  func.func @transform_5(%arg0: i32, %arg1: i32) -> (i32, i32) {
    %c0_i32 = arith.constant 0 : i32
    %c0_i32_0 = arith.constant 0 : i32
    %c0_i32_1 = arith.constant 0 : i32
    return %c0_i32, %c0_i32_0 : i32, i32
  }
  func.func @transform_6(%arg0: i32, %arg1: i32) -> (i32, i32) {
    %c0_i32 = arith.constant 0 : i32
    %c0_i32_0 = arith.constant 0 : i32
    return %arg1, %c0_i32 : i32, i32
  }
}

</mosaic_0001>

<llo_original>
// kernel: gcn_forward.1
$region0: #{gcn_forward.1}
  #allocation0 [shape = 'u32[]', space=smem, size = 0x4, offset = 0x4, fixed_abs, tag = 'smem constant byte address 0x4 - core index']
  #allocation1 [shape = 'u32[144,128]{1,0:T(1,128)}', space=vmem, size = 0x12000, scoped, tag = 'internal scratch']
  #allocation2 [shape = 'bf16[2,256,128]{2,1,0:T(8,128)(2,1)}', space=vmem, size = 0x20000, scoped, tag = 'scratch operand']
  %s0 = inlined_call_operand.vmem [shape: bf16[256,256], index: 0, kind: input, shape index: {}]
  %s1 = inlined_call_operand.vmem [shape: bf16[256,128], index: 1, kind: input, shape index: {}]
  %s2 = inlined_call_operand.vmem [shape: bf16[3,128,128], index: 2, kind: input, shape index: {}]
  %s3 = inlined_call_operand.vmem [shape: f32[3,1,128], index: 3, kind: input, shape index: {}]
  %s4 = inlined_call_operand.vmem [shape: bf16[128,128], index: 4, kind: input, shape index: {}]
  %s5 = inlined_call_operand.vmem [shape: f32[1,128], index: 5, kind: input, shape index: {}]
  %s6 = inlined_call_operand.vmem [shape: f32[256,128], index: 6, kind: output, shape index: {}]
  %s7 = sld [smem:[#allocation0]]
  $region69: #{gcn_forward.1} parent=0
    _
  %s9 = ssub.s32 1, %s7
  %s10 = scalar_select 0, %s9, %s7
  loop: start=0, step=1, limit=8
  $region2: #{gcn_forward.1} parent=0 // loop_pre_header
    _
  $region3: #{gcn_forward.1} parent=0 // loop_header
    %s12 = sphi 0, %s16
    %p13 = scmp.ge.s32.totalorder %s12, 8
    %s19 = sphi 0, %s31
    %s20 = sphi 0, %s27
    %s21 = sphi 0, %s19
    %s22 = sphi 0, %s20
    %s23 = sphi 0, %s21
    %s24 = sphi 0, %s22
    %s34 = sphi 0, %s36
    %s37 = sphi 0, %s34
    %s38 = sphi 0, %s37
    %s54 = sphi 0, %s38
    %s58 = sphi 0, %s58
    %s60 = sphi 0, %s58
    %s61 = sphi 0, %s60
    %s75 = sphi 0, %s61
    %s81 = sphi 0, %s83
    %s84 = sphi 0, %s81
    %s85 = sphi 0, %s84
    %s101 = sphi 0, %s85
    %s107 = sphi 0, %s109
    %s110 = sphi 0, %s107
    %s111 = sphi 0, %s110
    %s127 = sphi 0, %s111
    %s131 = sphi 0, %s131
    %s133 = sphi 0, %s131
    %s134 = sphi 0, %s133
    %s148 = sphi 0, %s134
    %s152 = sphi 0, %s152
    %s154 = sphi 0, %s152
    %s155 = sphi 0, %s154
    %s169 = sphi 0, %s155
    %s175 = sphi 0, %s177
    %s178 = sphi 0, %s175
    %s179 = sphi 0, %s178
    %s195 = sphi 0, %s179
  $region4: #{gcn_forward.1} parent=0 // loop_header_branch
    %15 = sbr.rel (%p13) target = $region8
  $region5: #{gcn_forward.1} parent=0 // loop_body
    %s17 = ssub.s32 %s12, 1
    %s18 = ssub.s32 %s12, 2
    %s25 = sadd.s32 1, %s20
    %p26 = scmp.ge.s32.totalorder %s25, 2
    %s27 = scalar_select %p26, 0, %s25
    %s28 = sadd.s32 1, %s19
    %s29 = scalar_select %p26, %s28, %s19
    %p30 = scmp.ge.s32.totalorder %s29, 3
    %s31 = scalar_select %p30, 0, %s29
    %s32 = ssub.s32 %s20, %s27
    %p33 = scmp.eq.s32.totalorder %s32, 0
    %s35 = sadd.s32 %s34, 1
    %s36 = scalar_select %p33, %s34, %s35
    %p39 = pneg %p33
    %p40 = scmp.eq.s32.totalorder %s12, 5
    %p41 = por %p39, %p40
    %p42 = scmp.ne.s32.totalorder %s34, %s37
    %p43 = scmp.eq.s32.totalorder %s12, 0
    %p44 = por %p42, %p43
    %p45 = scmp.ne.s32.totalorder %s34, %s37
    %p46 = scmp.eq.s32.totalorder %s17, 5
    %p47 = por %p45, %p46
    %p48 = scmp.ne.s32.totalorder %s37, %s38
    %p49 = scmp.eq.s32.totalorder %s17, 0
    %p50 = por %p48, %p49
    %p51 = scmp.ne.s32.totalorder %s37, %s38
    %p52 = scmp.eq.s32.totalorder %s18, 5
    %p53 = por %p51, %p52
    %p55 = scmp.ne.s32.totalorder %s38, %s54
    %p56 = scmp.eq.s32.totalorder %s18, 0
    %p57 = por %p55, %p56
    %s59 = sadd.s32 %s58, 1
    %p62 = scmp.eq.s32.totalorder %s12, 5
    %p63 = scmp.ne.s32.totalorder %s58, %s60
    %p64 = scmp.eq.s32.totalorder %s12, 0
    %p65 = por %p63, %p64
    %p66 = scmp.ne.s32.totalorder %s58, %s60
    %p67 = scmp.eq.s32.totalorder %s17, 5
    %p68 = por %p66, %p67
    %p69 = scmp.ne.s32.totalorder %s60, %s61
    %p70 = scmp.eq.s32.totalorder %s17, 0
    %p71 = por %p69, %p70
    %p72 = scmp.ne.s32.totalorder %s60, %s61
    %p73 = scmp.eq.s32.totalorder %s18, 5
    %p74 = por %p72, %p73
    %p76 = scmp.ne.s32.totalorder %s61, %s75
    %p77 = scmp.eq.s32.totalorder %s18, 0
    %p78 = por %p76, %p77
    %s79 = ssub.s32 %s19, %s31
    %p80 = scmp.eq.s32.totalorder %s79, 0
    %s82 = sadd.s32 %s81, 1
    %s83 = scalar_select %p80, %s81, %s82
    %p86 = pneg %p80
    %p87 = scmp.eq.s32.totalorder %s12, 5
    %p88 = por %p86, %p87
    %p89 = scmp.ne.s32.totalorder %s81, %s84
    %p90 = scmp.eq.s32.totalorder %s12, 0
    %p91 = por %p89, %p90
    %p92 = scmp.ne.s32.totalorder %s81, %s84
    %p93 = scmp.eq.s32.totalorder %s17, 5
    %p94 = por %p92, %p93
    %p95 = scmp.ne.s32.totalorder %s84, %s85
    %p96 = scmp.eq.s32.totalorder %s17, 0
    %p97 = por %p95, %p96
    %p98 = scmp.ne.s32.totalorder %s84, %s85
    %p99 = scmp.eq.s32.totalorder %s18, 5
    %p100 = por %p98, %p99
    %p102 = scmp.ne.s32.totalorder %s85, %s101
    %p103 = scmp.eq.s32.totalorder %s18, 0
    %p104 = por %p102, %p103
    %s105 = ssub.s32 %s19, %s31
    %p106 = scmp.eq.s32.totalorder %s105, 0
    %s108 = sadd.s32 %s107, 1
    %s109 = scalar_select %p106, %s107, %s108
    %p112 = pneg %p106
    %p113 = scmp.eq.s32.totalorder %s12, 5
    %p114 = por %p112, %p113
    %p115 = scmp.ne.s32.totalorder %s107, %s110
    %p116 = scmp.eq.s32.totalorder %s12, 0
    %p117 = por %p115, %p116
    %p118 = scmp.ne.s32.totalorder %s107, %s110
    %p119 = scmp.eq.s32.totalorder %s17, 5
    %p120 = por %p118, %p119
    %p121 = scmp.ne.s32.totalorder %s110, %s111
    %p122 = scmp.eq.s32.totalorder %s17, 0
    %p123 = por %p121, %p122
    %p124 = scmp.ne.s32.totalorder %s110, %s111
    %p125 = scmp.eq.s32.totalorder %s18, 5
    %p126 = por %p124, %p125
    %p128 = scmp.ne.s32.totalorder %s111, %s127
    %p129 = scmp.eq.s32.totalorder %s18, 0
    %p130 = por %p128, %p129
    %s132 = sadd.s32 %s131, 1
    %p135 = scmp.eq.s32.totalorder %s12, 5
    %p136 = scmp.ne.s32.totalorder %s131, %s133
    %p137 = scmp.eq.s32.totalorder %s12, 0
    %p138 = por %p136, %p137
    %p139 = scmp.ne.s32.totalorder %s131, %s133
    %p140 = scmp.eq.s32.totalorder %s17, 5
    %p141 = por %p139, %p140
    %p142 = scmp.ne.s32.totalorder %s133, %s134
    %p143 = scmp.eq.s32.totalorder %s17, 0
    %p144 = por %p142, %p143
    %p145 = scmp.ne.s32.totalorder %s133, %s134
    %p146 = scmp.eq.s32.totalorder %s18, 5
    %p147 = por %p145, %p146
    %p149 = scmp.ne.s32.totalorder %s134, %s148
    %p150 = scmp.eq.s32.totalorder %s18, 0
    %p151 = por %p149, %p150
    %s153 = sadd.s32 %s152, 1
    %p156 = scmp.eq.s32.totalorder %s12, 5
    %p157 = scmp.ne.s32.totalorder %s152, %s154
    %p158 = scmp.eq.s32.totalorder %s12, 0
    %p159 = por %p157, %p158
    %p160 = scmp.ne.s32.totalorder %s152, %s154
    %p161 = scmp.eq.s32.totalorder %s17, 5
    %p162 = por %p160, %p161
    %p163 = scmp.ne.s32.totalorder %s154, %s155
    %p164 = scmp.eq.s32.totalorder %s17, 0
    %p165 = por %p163, %p164
    %p166 = scmp.ne.s32.totalorder %s154, %s155
    %p167 = scmp.eq.s32.totalorder %s18, 5
    %p168 = por %p166, %p167
    %p170 = scmp.ne.s32.totalorder %s155, %s169
    %p171 = scmp.eq.s32.totalorder %s18, 0
    %p172 = por %p170, %p171
    %s173 = ssub.s32 %s20, %s27
    %p174 = scmp.eq.s32.totalorder %s173, 0
    %s176 = sadd.s32 %s175, 1
    %s177 = scalar_select %p174, %s175, %s176
    %p180 = pneg %p174
    %p181 = scmp.eq.s32.totalorder %s12, 5
    %p182 = por %p180, %p181
    %p183 = scmp.ne.s32.totalorder %s175, %s178
    %p184 = scmp.eq.s32.totalorder %s12, 0
    %p185 = por %p183, %p184
    %p186 = scmp.ne.s32.totalorder %s175, %s178
    %p187 = scmp.eq.s32.totalorder %s17, 5
    %p188 = por %p186, %p187
    %p189 = scmp.ne.s32.totalorder %s178, %s179
    %p190 = scmp.eq.s32.totalorder %s17, 0
    %p191 = por %p189, %p190
    %p192 = scmp.ne.s32.totalorder %s178, %s179
    %p193 = scmp.eq.s32.totalorder %s18, 5
    %p194 = por %p192, %p193
    %p196 = scmp.ne.s32.totalorder %s179, %s195
    %p197 = scmp.eq.s32.totalorder %s18, 0
    %p198 = por %p196, %p197
    %p199 = scmp.le.s32.totalorder 1, %s12
    %p200 = scmp.lt.s32.totalorder %s12, 7
    %p201 = pnand %p199, %p200
    %p202 = pneg %p201
    // Predicated region
    $region9: #{gcn_forward.1} parent=5 // pred_check
      _
    $region10: #{gcn_forward.1} parent=5 // pred_check_branch
      %204 = sbr.rel (%p201) target = $region12
    $region11: #{gcn_forward.1} parent=5 // pred_region
      %s205 = ssub.s32 %s12, 1
      // Predicated region
      $region13: #{gcn_forward.1} parent=11 // pred_check
        %p206 = pneg %p71
      $region14: #{gcn_forward.1} parent=11 // pred_check_branch
        %208 = sbr.rel (%p206) target = $region16
      $region15: #{gcn_forward.1} parent=11 // pred_region
        _
      $region16: #{gcn_forward.1} parent=11 // pred_fallthru
        _
      // Predicated region
      $region17: #{gcn_forward.1} parent=11 // pred_check
        %p209 = pneg %p144
      $region18: #{gcn_forward.1} parent=11 // pred_check_branch
        %211 = sbr.rel (%p209) target = $region20
      $region19: #{gcn_forward.1} parent=11 // pred_region
        _
      $region20: #{gcn_forward.1} parent=11 // pred_fallthru
        _
      // Predicated region
      $region21: #{gcn_forward.1} parent=11 // pred_check
        %p212 = pneg %p165
      $region22: #{gcn_forward.1} parent=11 // pred_check_branch
        %214 = sbr.rel (%p212) target = $region24
      $region23: #{gcn_forward.1} parent=11 // pred_region
        _
      $region24: #{gcn_forward.1} parent=11 // pred_fallthru
        _
    $region12: #{gcn_forward.1} parent=5 // pred_fallthru
      _
    %p215 = scmp.lt.s32.totalorder %s12, 6
    // Predicated region
    $region25: #{gcn_forward.1} parent=5 // pred_check
      %p216 = pneg %p215
    $region26: #{gcn_forward.1} parent=5 // pred_check_branch
      %218 = sbr.rel (%p216) target = $region28
    $region27: #{gcn_forward.1} parent=5 // pred_region
      // Predicated region
      $region29: #{gcn_forward.1} parent=27 // pred_check
        %p219 = pneg %p44
      $region30: #{gcn_forward.1} parent=27 // pred_check_branch
        %221 = sbr.rel (%p219) target = $region32
      $region31: #{gcn_forward.1} parent=27 // pred_region
        %s222 = smul.u32 16, %s20
        %p223 = scmp.lt.s32.totalorder %s222, 31
        %s224 = scalar_select %p223, %s222, 31
        %s225 = smul.addr %s224, 2
        %s226 = smul.addr %s225, 4
        %s227 = scalar_lea.vmem %s0, %s226
        %s228 = smul.u32 16, %s20
      $region32: #{gcn_forward.1} parent=27 // pred_fallthru
        _
      // Predicated region
      $region33: #{gcn_forward.1} parent=27 // pred_check
        %p229 = pneg %p91
      $region34: #{gcn_forward.1} parent=27 // pred_check_branch
        %231 = sbr.rel (%p229) target = $region36
      $region35: #{gcn_forward.1} parent=27 // pred_region
        %p232 = scmp.lt.s32.totalorder %s19, 2
        %s233 = scalar_select %p232, %s19, 2
        %s234 = smul.addr %s233, 16
        %s235 = smul.addr %s234, 4
        %s236 = scalar_lea.vmem %s2, %s235
      $region36: #{gcn_forward.1} parent=27 // pred_fallthru
        _
      // Predicated region
      $region37: #{gcn_forward.1} parent=27 // pred_check
        %p237 = pneg %p117
      $region38: #{gcn_forward.1} parent=27 // pred_check_branch
        %239 = sbr.rel (%p237) target = $region40
      $region39: #{gcn_forward.1} parent=27 // pred_region
        %p240 = scmp.lt.s32.totalorder %s19, 2
        %s241 = scalar_select %p240, %s19, 2
        %s242 = scalar_lea.vmem %s3, %s241
      $region40: #{gcn_forward.1} parent=27 // pred_fallthru
        _
    $region28: #{gcn_forward.1} parent=5 // pred_fallthru
      _
    %p243 = scmp.le.s32.totalorder 1, %s12
    %p244 = scmp.lt.s32.totalorder %s12, 7
    %p245 = pnand %p243, %p244
    %p246 = pneg %p245
    // Predicated region
    $region41: #{gcn_forward.1} parent=5 // pred_check
      _
    $region42: #{gcn_forward.1} parent=5 // pred_check_branch
      %248 = sbr.rel (%p245) target = $region44
    $region43: #{gcn_forward.1} parent=5 // pred_region
      %s249 = ssub.s32 %s12, 1
      %s250 = smul.u32 16, %s22
      %p251 = scmp.lt.s32.totalorder %s250, 31
      %s252 = scalar_select %p251, %s250, 31
      %s253 = smul.addr %s252, 2
      %s254 = smul.addr %s253, 4
      %s255 = scalar_lea.vmem %s0, %s254
      %p256 = pneg %p50
      %p257 = pneg %p47
      %p258 = pneg %p71
      %p259 = pneg %p68
      %p260 = scmp.lt.s32.totalorder %s21, 2
      %s261 = scalar_select %p260, %s21, 2
      %s262 = smul.addr %s261, 16
      %s263 = smul.addr %s262, 4
      %s264 = scalar_lea.vmem %s2, %s263
      %p265 = pneg %p97
      %p266 = pneg %p94
      %p267 = scmp.lt.s32.totalorder %s21, 2
      %s268 = scalar_select %p267, %s21, 2
      %s269 = scalar_lea.vmem %s3, %s268
      %p270 = pneg %p123
      %p271 = pneg %p120
      %p272 = pneg %p144
      %p273 = pneg %p141
      %p274 = pneg %p165
      %p275 = pneg %p162
      %p276 = pneg %p191
      %p277 = pneg %p188
      %s278 = smul.u32 16, %s22
      %p279 = scmp.lt.s32.totalorder %s278, 31
      %s280 = scalar_select %p279, %s278, 31
      %s281 = smul.addr %s280, 8
      %s282 = scalar_lea.vmem %s6, %s281
      %s283 = smul.u32 16, %s22
      %p284 = scmp.lt.s32.totalorder %s283, 31
      %s285 = scalar_select %p284, %s283, 31
      %s286 = smul.addr %s285, 2
      %s287 = smul.addr %s286, 4
      %s288 = scalar_lea.vmem %s0, %s287
      %s289 = smul.u32 16, %s22
      %p290 = scmp.lt.s32.totalorder %s21, 2
      %s291 = scalar_select %p290, %s21, 2
      %s292 = smul.addr %s291, 16
      %s293 = smul.addr %s292, 4
      %s294 = scalar_lea.vmem %s2, %s293
      %p295 = scmp.lt.s32.totalorder %s21, 2
      %s296 = scalar_select %p295, %s21, 2
      %s297 = scalar_lea.vmem %s3, %s296
      %s298 = smul.u32 16, %s22
      %p299 = scmp.lt.s32.totalorder %s298, 31
      %s300 = scalar_select %p299, %s298, 31
      %s301 = smul.addr %s300, 8
      %s302 = scalar_lea.vmem %s6, %s301
      %s303 = smul.u32 16, %s22
      %s305 = smul.u32 %s22, 128
      %p306 = scmp.eq.s32.totalorder %s21, 0
      // Predicated region
      $region45: #{gcn_forward.1} parent=43 // pred_check
        %p307 = pneg %p306
      $region46: #{gcn_forward.1} parent=43 // pred_check_branch
        %309 = sbr.rel (%p307) target = $region48
      $region47: #{gcn_forward.1} parent=43 // pred_region
        %v310 = vld [vmem:[%s1] sm:$0xf]
        %v311 = vld [vmem:[%s1 + $0x4] sm:$0xf]
        %v312 = vld [vmem:[%s1 + $0x8] sm:$0xf]
        %v313 = vld [vmem:[%s1 + $0xc] sm:$0xf]
        %v314 = vld [vmem:[%s1 + $0x10] sm:$0xf]
        %v315 = vld [vmem:[%s1 + $0x14] sm:$0xf]
        %v316 = vld [vmem:[%s1 + $0x18] sm:$0xf]
        %v317 = vld [vmem:[%s1 + $0x1c] sm:$0xf]
        %v318 = vld [vmem:[%s1 + $0x20] sm:$0xf]
        %v319 = vld [vmem:[%s1 + $0x24] sm:$0xf]
        %v320 = vld [vmem:[%s1 + $0x28] sm:$0xf]
        %v321 = vld [vmem:[%s1 + $0x2c] sm:$0xf]
        %v322 = vld [vmem:[%s1 + $0x30] sm:$0xf]
        %v323 = vld [vmem:[%s1 + $0x34] sm:$0xf]
        %v324 = vld [vmem:[%s1 + $0x38] sm:$0xf]
        %v325 = vld [vmem:[%s1 + $0x3c] sm:$0xf]
        %v326 = vld [vmem:[%s1 + $0x40] sm:$0xf]
        %v327 = vld [vmem:[%s1 + $0x44] sm:$0xf]
        %v328 = vld [vmem:[%s1 + $0x48] sm:$0xf]
        %v329 = vld [vmem:[%s1 + $0x4c] sm:$0xf]
        %v330 = vld [vmem:[%s1 + $0x50] sm:$0xf]
        %v331 = vld [vmem:[%s1 + $0x54] sm:$0xf]
        %v332 = vld [vmem:[%s1 + $0x58] sm:$0xf]
        %v333 = vld [vmem:[%s1 + $0x5c] sm:$0xf]
        %v334 = vld [vmem:[%s1 + $0x60] sm:$0xf]
        %v335 = vld [vmem:[%s1 + $0x64] sm:$0xf]
        %v336 = vld [vmem:[%s1 + $0x68] sm:$0xf]
        %v337 = vld [vmem:[%s1 + $0x6c] sm:$0xf]
        %v338 = vld [vmem:[%s1 + $0x70] sm:$0xf]
        %v339 = vld [vmem:[%s1 + $0x74] sm:$0xf]
        %v340 = vld [vmem:[%s1 + $0x78] sm:$0xf]
        %v341 = vld [vmem:[%s1 + $0x7c] sm:$0xf]
        %v342 = vld [vmem:[%s288] sm:$0xff]
        %v343 = vld [vmem:[%s288 + $0x8] sm:$0xff]
        %v344 = vld [vmem:[%s288 + $0x10] sm:$0xff]
        %v345 = vld [vmem:[%s288 + $0x18] sm:$0xff]
        %v346 = vld [vmem:[%s288 + $0x20] sm:$0xff]
        %v347 = vld [vmem:[%s288 + $0x28] sm:$0xff]
        %v348 = vld [vmem:[%s288 + $0x30] sm:$0xff]
        %v349 = vld [vmem:[%s288 + $0x38] sm:$0xff]
        %v350 = vld [vmem:[%s288 + $0x40] sm:$0xff]
        %v351 = vld [vmem:[%s288 + $0x48] sm:$0xff]
        %v352 = vld [vmem:[%s288 + $0x50] sm:$0xff]
        %v353 = vld [vmem:[%s288 + $0x58] sm:$0xff]
        %v354 = vld [vmem:[%s288 + $0x60] sm:$0xff]
        %v355 = vld [vmem:[%s288 + $0x68] sm:$0xff]
        %v356 = vld [vmem:[%s288 + $0x70] sm:$0xff]
        %v357 = vld [vmem:[%s288 + $0x78] sm:$0xff]
        %v374 = vunpack.c.l.b16 %v342
        %v375 = vunpack.c.h.b16 %v342
        %v376 = vunpack.c.l.b16 %v343
        %v377 = vunpack.c.h.b16 %v343
        %v378 = vunpack.c.l.b16 %v344
        %v379 = vunpack.c.h.b16 %v344
        %v380 = vunpack.c.l.b16 %v345
        %v381 = vunpack.c.h.b16 %v345
        %v382 = vunpack.c.l.b16 %v346
        %v383 = vunpack.c.h.b16 %v346
        %v384 = vunpack.c.l.b16 %v347
        %v385 = vunpack.c.h.b16 %v347
        %v386 = vunpack.c.l.b16 %v348
        %v387 = vunpack.c.h.b16 %v348
        %v388 = vunpack.c.l.b16 %v349
        %v389 = vunpack.c.h.b16 %v349
        %v390 = vunpack.c.l.b16 %v350
        %v391 = vunpack.c.h.b16 %v350
        %v392 = vunpack.c.l.b16 %v351
        %v393 = vunpack.c.h.b16 %v351
        %v394 = vunpack.c.l.b16 %v352
        %v395 = vunpack.c.h.b16 %v352
        %v396 = vunpack.c.l.b16 %v353
        %v397 = vunpack.c.h.b16 %v353
        %v398 = vunpack.c.l.b16 %v354
        %v399 = vunpack.c.h.b16 %v354
        %v400 = vunpack.c.l.b16 %v355
        %v401 = vunpack.c.h.b16 %v355
        %v402 = vunpack.c.l.b16 %v356
        %v403 = vunpack.c.h.b16 %v356
        %v404 = vunpack.c.l.b16 %v357
        %v405 = vunpack.c.h.b16 %v357
        %v406 = vpack.c.b16 %v376, %v374
        %v407 = vpack.c.b16 %v377, %v375
        %v408 = vpack.c.b16 %v380, %v378
        %v409 = vpack.c.b16 %v381, %v379
        %v410 = vpack.c.b16 %v384, %v382
        %v411 = vpack.c.b16 %v385, %v383
        %v412 = vpack.c.b16 %v388, %v386
        %v413 = vpack.c.b16 %v389, %v387
        %v414 = vpack.c.b16 %v392, %v390
        %v415 = vpack.c.b16 %v393, %v391
        %v416 = vpack.c.b16 %v396, %v394
        %v417 = vpack.c.b16 %v397, %v395
        %v418 = vpack.c.b16 %v400, %v398
        %v419 = vpack.c.b16 %v401, %v399
        %v420 = vpack.c.b16 %v404, %v402
        %v421 = vpack.c.b16 %v405, %v403
        %v470 = vunpack.c.l.b16 %v310
        %v471 = vunpack.c.l.b16 %v311
        %v472 = vunpack.c.l.b16 %v312
        %v473 = vunpack.c.l.b16 %v313
        %v474 = vunpack.c.l.b16 %v314
        %v475 = vunpack.c.l.b16 %v315
        %v476 = vunpack.c.l.b16 %v316
        %v477 = vunpack.c.l.b16 %v317
        %v478 = vunpack.c.l.b16 %v318
        %v479 = vunpack.c.l.b16 %v319
        %v480 = vunpack.c.l.b16 %v320
        %v481 = vunpack.c.l.b16 %v321
        %v482 = vunpack.c.l.b16 %v322
        %v483 = vunpack.c.l.b16 %v323
        %v484 = vunpack.c.l.b16 %v324
        %v485 = vunpack.c.l.b16 %v325
        %v486 = vunpack.c.l.b16 %v326
        %v487 = vunpack.c.l.b16 %v327
        %v488 = vunpack.c.l.b16 %v328
        %v489 = vunpack.c.l.b16 %v329
        %v490 = vunpack.c.l.b16 %v330
        %v491 = vunpack.c.l.b16 %v331
        %v492 = vunpack.c.l.b16 %v332
        %v493 = vunpack.c.l.b16 %v333
        %v494 = vunpack.c.l.b16 %v334
        %v495 = vunpack.c.l.b16 %v335
        %v496 = vunpack.c.l.b16 %v336
        %v497 = vunpack.c.l.b16 %v337
        %v498 = vunpack.c.l.b16 %v338
        %v499 = vunpack.c.l.b16 %v339
        %v500 = vunpack.c.l.b16 %v340
        %v501 = vunpack.c.l.b16 %v341
        %v502 = vpack.c.b16 %v471, %v470
        %v503 = vpack.c.b16 %v473, %v472
        %v504 = vpack.c.b16 %v475, %v474
        %v505 = vpack.c.b16 %v477, %v476
        %v506 = vpack.c.b16 %v479, %v478
        %v507 = vpack.c.b16 %v481, %v480
        %v508 = vpack.c.b16 %v483, %v482
        %v509 = vpack.c.b16 %v485, %v484
        %v510 = vpack.c.b16 %v487, %v486
        %v511 = vpack.c.b16 %v489, %v488
        %v512 = vpack.c.b16 %v491, %v490
        %v513 = vpack.c.b16 %v493, %v492
        %v514 = vpack.c.b16 %v495, %v494
        %v515 = vpack.c.b16 %v497, %v496
        %v516 = vpack.c.b16 %v499, %v498
        %v517 = vpack.c.b16 %v501, %v500
        %534 = vmatprep.subr.bf16.mxu0 0
        %535 = vmatpush1.bf16.msra.mxu0 %v509
        %536 = vmatprep.subr.bf16.mxu0 0
        %537 = vmatpush1.bf16.msra.mxu0 %v508
        %538 = vmatprep.subr.bf16.mxu0 0
        %539 = vmatpush1.bf16.msra.mxu0 %v507
        %540 = vmatprep.subr.bf16.mxu0 0
        %541 = vmatpush1.bf16.msra.mxu0 %v506
        %542 = vmatprep.subr.bf16.mxu0 0
        %543 = vmatpush1.bf16.msra.mxu0 %v505
        %544 = vmatprep.subr.bf16.mxu0 0
        %545 = vmatpush1.bf16.msra.mxu0 %v504
        %546 = vmatprep.subr.bf16.mxu0 0
        %547 = vmatpush1.bf16.msra.mxu0 %v503
        %548 = vmatprep.subr.bf16.mxu0 0
        %549 = vmatpush1.bf16.msra.mxu0 %v502
        %550 = vmatprep.subr.bf16.mxu0 0
        %551 = vmatpush2.bf16.msra.mxu0 %v517
        %552 = vmatprep.subr.bf16.mxu0 0
        %553 = vmatpush2.bf16.msra.mxu0 %v516
        %554 = vmatprep.subr.bf16.mxu0 0
        %555 = vmatpush2.bf16.msra.mxu0 %v515
        %556 = vmatprep.subr.bf16.mxu0 0
        %557 = vmatpush2.bf16.msra.mxu0 %v514
        %558 = vmatprep.subr.bf16.mxu0 0
        %559 = vmatpush2.bf16.msra.mxu0 %v513
        %560 = vmatprep.subr.bf16.mxu0 0
        %561 = vmatpush2.bf16.msra.mxu0 %v512
        %562 = vmatprep.subr.bf16.mxu0 0
        %563 = vmatpush2.bf16.msra.mxu0 %v511
        %564 = vmatprep.subr.bf16.mxu0 0
        %565 = vmatpush2.bf16.msra.mxu0 %v510
        %566 = vmatprep.mubr.bf16.mxu0 %v407
        %567 = vmatmul.mubr.bf16.gmra.mxu0 %v406
        %v568 = vpop.f32.mrf.mxu0
        %v569 = vadd.f32 0.0, %v568
        %v570 = vpop.f32.mrf.mxu0
        %v571 = vpop.f32.mrf.mxu0
        %v572 = vadd.f32 0.0, %v571
        %v573 = vpop.f32.mrf.mxu0
        %574 = vmatprep.mubr.bf16.mxu0 %v409
        %575 = vmatmul.mubr.bf16.gmra.mxu0 %v408
        %v576 = vpop.f32.mrf.mxu0
        %v577 = vadd.f32 0.0, %v576
        %v578 = vpop.f32.mrf.mxu0
        %v579 = vpop.f32.mrf.mxu0
        %v580 = vadd.f32 0.0, %v579
        %v581 = vpop.f32.mrf.mxu0
        %582 = vmatprep.mubr.bf16.mxu0 %v411
        %583 = vmatmul.mubr.bf16.gmra.mxu0 %v410
        %v584 = vpop.f32.mrf.mxu0
        %v585 = vadd.f32 0.0, %v584
        %v586 = vpop.f32.mrf.mxu0
        %v587 = vpop.f32.mrf.mxu0
        %v588 = vadd.f32 0.0, %v587
        %v589 = vpop.f32.mrf.mxu0
        %590 = vmatprep.mubr.bf16.mxu0 %v413
        %591 = vmatmul.mubr.bf16.gmra.mxu0 %v412
        %v592 = vpop.f32.mrf.mxu0
        %v593 = vadd.f32 0.0, %v592
        %v594 = vpop.f32.mrf.mxu0
        %v595 = vpop.f32.mrf.mxu0
        %v596 = vadd.f32 0.0, %v595
        %v597 = vpop.f32.mrf.mxu0
        %598 = vmatprep.mubr.bf16.mxu0 %v415
        %599 = vmatmul.mubr.bf16.gmra.mxu0 %v414
        %v600 = vpop.f32.mrf.mxu0
        %v601 = vadd.f32 0.0, %v600
        %v602 = vpop.f32.mrf.mxu0
        %v603 = vpop.f32.mrf.mxu0
        %v604 = vadd.f32 0.0, %v603
        %v605 = vpop.f32.mrf.mxu0
        %606 = vmatprep.mubr.bf16.mxu0 %v417
        %607 = vmatmul.mubr.bf16.gmra.mxu0 %v416
        %v608 = vpop.f32.mrf.mxu0
        %v609 = vadd.f32 0.0, %v608
        %v610 = vpop.f32.mrf.mxu0
        %v611 = vpop.f32.mrf.mxu0
        %v612 = vadd.f32 0.0, %v611
        %v613 = vpop.f32.mrf.mxu0
        %614 = vmatprep.mubr.bf16.mxu0 %v419
        %615 = vmatmul.mubr.bf16.gmra.mxu0 %v418
        %v616 = vpop.f32.mrf.mxu0
        %v617 = vadd.f32 0.0, %v616
        %v618 = vpop.f32.mrf.mxu0
        %v619 = vpop.f32.mrf.mxu0
        %v620 = vadd.f32 0.0, %v619
        %v621 = vpop.f32.mrf.mxu0
        %622 = vmatprep.mubr.bf16.mxu0 %v421
        %623 = vmatmul.mubr.bf16.gmra.mxu0 %v420
        %v624 = vpop.f32.mrf.mxu0
        %v625 = vadd.f32 0.0, %v624
        %v626 = vpop.f32.mrf.mxu0
        %v627 = vpop.f32.mrf.mxu0
        %v628 = vadd.f32 0.0, %v627
        %v629 = vpop.f32.mrf.mxu0
        %630 = vdwg.mxu0
        %v631 = vpack.c.bf16 %v572, %v569
        %v632 = vpack.c.bf16 %v580, %v577
        %v633 = vpack.c.bf16 %v588, %v585
        %v634 = vpack.c.bf16 %v596, %v593
        %v635 = vpack.c.bf16 %v604, %v601
        %v636 = vpack.c.bf16 %v612, %v609
        %v637 = vpack.c.bf16 %v620, %v617
        %v638 = vpack.c.bf16 %v628, %v625
        %v639 = vld [vmem:[%s294] sm:$0xf]
        %v640 = vld [vmem:[%s294 + $0x4] sm:$0xf]
        %v641 = vld [vmem:[%s294 + $0x8] sm:$0xf]
        %v642 = vld [vmem:[%s294 + $0xc] sm:$0xf]
        %v643 = vld [vmem:[%s294 + $0x10] sm:$0xf]
        %v644 = vld [vmem:[%s294 + $0x14] sm:$0xf]
        %v645 = vld [vmem:[%s294 + $0x18] sm:$0xf]
        %v646 = vld [vmem:[%s294 + $0x1c] sm:$0xf]
        %v647 = vld [vmem:[%s294 + $0x20] sm:$0xf]
        %v648 = vld [vmem:[%s294 + $0x24] sm:$0xf]
        %v649 = vld [vmem:[%s294 + $0x28] sm:$0xf]
        %v650 = vld [vmem:[%s294 + $0x2c] sm:$0xf]
        %v651 = vld [vmem:[%s294 + $0x30] sm:$0xf]
        %v652 = vld [vmem:[%s294 + $0x34] sm:$0xf]
        %v653 = vld [vmem:[%s294 + $0x38] sm:$0xf]
        %v654 = vld [vmem:[%s294 + $0x3c] sm:$0xf]
        %v655 = vld [vmem:[%s297] sm:$0x1]
        %v657 = vlaneseq
        %v658 = vshrl.u32 %v657, 7
        %v659 = vsub.s32 0, %v658
        %v660 = vrot.slane %v655, %v659
        %v678 = vunpack.c.l.b16 %v639
        %v679 = vunpack.c.l.b16 %v640
        %v680 = vunpack.c.l.b16 %v641
        %v681 = vunpack.c.l.b16 %v642
        %v682 = vunpack.c.l.b16 %v643
        %v683 = vunpack.c.l.b16 %v644
        %v684 = vunpack.c.l.b16 %v645
        %v685 = vunpack.c.l.b16 %v646
        %v686 = vunpack.c.l.b16 %v647
        %v687 = vunpack.c.l.b16 %v648
        %v688 = vunpack.c.l.b16 %v649
        %v689 = vunpack.c.l.b16 %v650
        %v690 = vunpack.c.l.b16 %v651
        %v691 = vunpack.c.l.b16 %v652
        %v692 = vunpack.c.l.b16 %v653
        %v693 = vunpack.c.l.b16 %v654
        %v694 = vpack.c.b16 %v679, %v678
        %v695 = vpack.c.b16 %v681, %v680
        %v696 = vpack.c.b16 %v683, %v682
        %v697 = vpack.c.b16 %v685, %v684
        %v698 = vpack.c.b16 %v687, %v686
        %v699 = vpack.c.b16 %v689, %v688
        %v700 = vpack.c.b16 %v691, %v690
        %v701 = vpack.c.b16 %v693, %v692
        %710 = vmatprep.subr.bf16.mxu0 0
        %711 = vmatpush1.bf16.msra.mxu0 %v701
        %712 = vmatprep.subr.bf16.mxu0 0
        %713 = vmatpush1.bf16.msra.mxu0 %v700
        %714 = vmatprep.subr.bf16.mxu0 0
        %715 = vmatpush1.bf16.msra.mxu0 %v699
        %716 = vmatprep.subr.bf16.mxu0 0
        %717 = vmatpush1.bf16.msra.mxu0 %v698
        %718 = vmatprep.subr.bf16.mxu0 0
        %719 = vmatpush1.bf16.msra.mxu0 %v697
        %720 = vmatprep.subr.bf16.mxu0 0
        %721 = vmatpush1.bf16.msra.mxu0 %v696
        %722 = vmatprep.subr.bf16.mxu0 0
        %723 = vmatpush1.bf16.msra.mxu0 %v695
        %724 = vmatprep.subr.bf16.mxu0 0
        %725 = vmatpush1.bf16.msra.mxu0 %v694
        %726 = vmatprep.subr.bf16.mxu0 0
        %727 = vmatpush2.bf16.msra.mxu0 0
        %728 = vmatprep.subr.bf16.mxu0 0
        %729 = vmatpush2.bf16.msra.mxu0 0
        %730 = vmatprep.subr.bf16.mxu0 0
        %731 = vmatpush2.bf16.msra.mxu0 0
        %732 = vmatprep.subr.bf16.mxu0 0
        %733 = vmatpush2.bf16.msra.mxu0 0
        %734 = vmatprep.subr.bf16.mxu0 0
        %735 = vmatpush2.bf16.msra.mxu0 0
        %736 = vmatprep.subr.bf16.mxu0 0
        %737 = vmatpush2.bf16.msra.mxu0 0
        %738 = vmatprep.subr.bf16.mxu0 0
        %739 = vmatpush2.bf16.msra.mxu0 0
        %740 = vmatprep.subr.bf16.mxu0 0
        %741 = vmatpush2.bf16.msra.mxu0 0
        %742 = vmatprep.mubr.bf16.mxu0 0
        %743 = vmatmul.mubr.bf16.gmra.mxu0 %v631
        %v744 = vpop.f32.mrf.mxu0
        %v745 = vadd.f32 %v660, %v744
        %v746 = vpop.f32.mrf.mxu0
        %v747 = vpop.f32.mrf.mxu0
        %v748 = vadd.f32 %v660, %v747
        %v749 = vpop.f32.mrf.mxu0
        %750 = vmatprep.mubr.bf16.mxu0 0
        %751 = vmatmul.mubr.bf16.gmra.mxu0 %v632
        %v752 = vpop.f32.mrf.mxu0
        %v753 = vadd.f32 %v660, %v752
        %v754 = vpop.f32.mrf.mxu0
        %v755 = vpop.f32.mrf.mxu0
        %v756 = vadd.f32 %v660, %v755
        %v757 = vpop.f32.mrf.mxu0
        %758 = vmatprep.mubr.bf16.mxu0 0
        %759 = vmatmul.mubr.bf16.gmra.mxu0 %v633
        %v760 = vpop.f32.mrf.mxu0
        %v761 = vadd.f32 %v660, %v760
        %v762 = vpop.f32.mrf.mxu0
        %v763 = vpop.f32.mrf.mxu0
        %v764 = vadd.f32 %v660, %v763
        %v765 = vpop.f32.mrf.mxu0
        %766 = vmatprep.mubr.bf16.mxu0 0
        %767 = vmatmul.mubr.bf16.gmra.mxu0 %v634
        %v768 = vpop.f32.mrf.mxu0
        %v769 = vadd.f32 %v660, %v768
        %v770 = vpop.f32.mrf.mxu0
        %v771 = vpop.f32.mrf.mxu0
        %v772 = vadd.f32 %v660, %v771
        %v773 = vpop.f32.mrf.mxu0
        %774 = vmatprep.mubr.bf16.mxu0 0
        %775 = vmatmul.mubr.bf16.gmra.mxu0 %v635
        %v776 = vpop.f32.mrf.mxu0
        %v777 = vadd.f32 %v660, %v776
        %v778 = vpop.f32.mrf.mxu0
        %v779 = vpop.f32.mrf.mxu0
        %v780 = vadd.f32 %v660, %v779
        %v781 = vpop.f32.mrf.mxu0
        %782 = vmatprep.mubr.bf16.mxu0 0
        %783 = vmatmul.mubr.bf16.gmra.mxu0 %v636
        %v784 = vpop.f32.mrf.mxu0
        %v785 = vadd.f32 %v660, %v784
        %v786 = vpop.f32.mrf.mxu0
        %v787 = vpop.f32.mrf.mxu0
        %v788 = vadd.f32 %v660, %v787
        %v789 = vpop.f32.mrf.mxu0
        %790 = vmatprep.mubr.bf16.mxu0 0
        %791 = vmatmul.mubr.bf16.gmra.mxu0 %v637
        %v792 = vpop.f32.mrf.mxu0
        %v793 = vadd.f32 %v660, %v792
        %v794 = vpop.f32.mrf.mxu0
        %v795 = vpop.f32.mrf.mxu0
        %v796 = vadd.f32 %v660, %v795
        %v797 = vpop.f32.mrf.mxu0
        %798 = vmatprep.mubr.bf16.mxu0 0
        %799 = vmatmul.mubr.bf16.gmra.mxu0 %v638
        %v800 = vpop.f32.mrf.mxu0
        %v801 = vadd.f32 %v660, %v800
        %v802 = vpop.f32.mrf.mxu0
        %v803 = vpop.f32.mrf.mxu0
        %v804 = vadd.f32 %v660, %v803
        %v805 = vpop.f32.mrf.mxu0
        %806 = vdwg.mxu0
        %v807 = vmax.f32 %v745, 0.0
        %v808 = vmax.f32 %v748, 0.0
        %v809 = vmax.f32 %v753, 0.0
        %v810 = vmax.f32 %v756, 0.0
        %v811 = vmax.f32 %v761, 0.0
        %v812 = vmax.f32 %v764, 0.0
        %v813 = vmax.f32 %v769, 0.0
        %v814 = vmax.f32 %v772, 0.0
        %v815 = vmax.f32 %v777, 0.0
        %v816 = vmax.f32 %v780, 0.0
        %v817 = vmax.f32 %v785, 0.0
        %v818 = vmax.f32 %v788, 0.0
        %v819 = vmax.f32 %v793, 0.0
        %v820 = vmax.f32 %v796, 0.0
        %v821 = vmax.f32 %v801, 0.0
        %v822 = vmax.f32 %v804, 0.0
        %v823 = vpack.c.bf16 %v808, %v807
        %v824 = vpack.c.bf16 %v810, %v809
        %v825 = vpack.c.bf16 %v812, %v811
        %v826 = vpack.c.bf16 %v814, %v813
        %v827 = vpack.c.bf16 %v816, %v815
        %v828 = vpack.c.bf16 %v818, %v817
        %v829 = vpack.c.bf16 %v820, %v819
        %v830 = vpack.c.bf16 %v822, %v821
        %v839 = vunpack.c.l.b16 %v823
        %v840 = vunpack.c.h.b16 %v823
        %v841 = vunpack.c.l.b16 %v824
        %v842 = vunpack.c.h.b16 %v824
        %v843 = vunpack.c.l.b16 %v825
        %v844 = vunpack.c.h.b16 %v825
        %v845 = vunpack.c.l.b16 %v826
        %v846 = vunpack.c.h.b16 %v826
        %v847 = vunpack.c.l.b16 %v827
        %v848 = vunpack.c.h.b16 %v827
        %v849 = vunpack.c.l.b16 %v828
        %v850 = vunpack.c.h.b16 %v828
        %v851 = vunpack.c.l.b16 %v829
        %v852 = vunpack.c.h.b16 %v829
        %v853 = vunpack.c.l.b16 %v830
        %v854 = vunpack.c.h.b16 %v830
        %v855 = vpack.c.b16 %v839, %v839
        %v856 = vpack.c.b16 %v840, %v840
        %v857 = vpack.c.b16 %v841, %v841
        %v858 = vpack.c.b16 %v842, %v842
        %v859 = vpack.c.b16 %v843, %v843
        %v860 = vpack.c.b16 %v844, %v844
        %v861 = vpack.c.b16 %v845, %v845
        %v862 = vpack.c.b16 %v846, %v846
        %v863 = vpack.c.b16 %v847, %v847
        %v864 = vpack.c.b16 %v848, %v848
        %v865 = vpack.c.b16 %v849, %v849
        %v866 = vpack.c.b16 %v850, %v850
        %v867 = vpack.c.b16 %v851, %v851
        %v868 = vpack.c.b16 %v852, %v852
        %v869 = vpack.c.b16 %v853, %v853
        %v870 = vpack.c.b16 %v854, %v854
        %s887 = sshra.s32 %s305, 3
        %s888 = sand.u32 %s305, 7
        %s889 = smul.addr %s887, 4
        %s890 = scalar_lea.vmem [#allocation2], %s889
        %891 = vst [vmem:[%s890] sm:$0xf] %v855
        %892 = vst [vmem:[%s890 + $0x4] sm:$0xf] %v856
        %893 = vst [vmem:[%s890 + $0x8] sm:$0xf] %v857
        %894 = vst [vmem:[%s890 + $0xc] sm:$0xf] %v858
        %895 = vst [vmem:[%s890 + $0x10] sm:$0xf] %v859
        %896 = vst [vmem:[%s890 + $0x14] sm:$0xf] %v860
        %897 = vst [vmem:[%s890 + $0x18] sm:$0xf] %v861
        %898 = vst [vmem:[%s890 + $0x1c] sm:$0xf] %v862
        %899 = vst [vmem:[%s890 + $0x20] sm:$0xf] %v863
        %900 = vst [vmem:[%s890 + $0x24] sm:$0xf] %v864
        %901 = vst [vmem:[%s890 + $0x28] sm:$0xf] %v865
        %902 = vst [vmem:[%s890 + $0x2c] sm:$0xf] %v866
        %903 = vst [vmem:[%s890 + $0x30] sm:$0xf] %v867
        %904 = vst [vmem:[%s890 + $0x34] sm:$0xf] %v868
        %905 = vst [vmem:[%s890 + $0x38] sm:$0xf] %v869
        %906 = vst [vmem:[%s890 + $0x3c] sm:$0xf] %v870
      $region48: #{gcn_forward.1} parent=43 // pred_fallthru
        _
      %p907 = scmp.eq.s32.totalorder %s21, 1
      // Predicated region
      $region49: #{gcn_forward.1} parent=43 // pred_check
        %p908 = pneg %p907
      $region50: #{gcn_forward.1} parent=43 // pred_check_branch
        %910 = sbr.rel (%p908) target = $region52
      $region51: #{gcn_forward.1} parent=43 // pred_region
        %v911 = vld [vmem:[#allocation2] sm:$0xf]
        %v912 = vld [vmem:[#allocation2 + $0x4] sm:$0xf]
        %v913 = vld [vmem:[#allocation2 + $0x8] sm:$0xf]
        %v914 = vld [vmem:[#allocation2 + $0xc] sm:$0xf]
        %v915 = vld [vmem:[#allocation2 + $0x10] sm:$0xf]
        %v916 = vld [vmem:[#allocation2 + $0x14] sm:$0xf]
        %v917 = vld [vmem:[#allocation2 + $0x18] sm:$0xf]
        %v918 = vld [vmem:[#allocation2 + $0x1c] sm:$0xf]
        %v919 = vld [vmem:[#allocation2 + $0x20] sm:$0xf]
        %v920 = vld [vmem:[#allocation2 + $0x24] sm:$0xf]
        %v921 = vld [vmem:[#allocation2 + $0x28] sm:$0xf]
        %v922 = vld [vmem:[#allocation2 + $0x2c] sm:$0xf]
        %v923 = vld [vmem:[#allocation2 + $0x30] sm:$0xf]
        %v924 = vld [vmem:[#allocation2 + $0x34] sm:$0xf]
        %v925 = vld [vmem:[#allocation2 + $0x38] sm:$0xf]
        %v926 = vld [vmem:[#allocation2 + $0x3c] sm:$0xf]
        %v927 = vld [vmem:[#allocation2 + $0x40] sm:$0xf]
        %v928 = vld [vmem:[#allocation2 + $0x44] sm:$0xf]
        %v929 = vld [vmem:[#allocation2 + $0x48] sm:$0xf]
        %v930 = vld [vmem:[#allocation2 + $0x4c] sm:$0xf]
        %v931 = vld [vmem:[#allocation2 + $0x50] sm:$0xf]
        %v932 = vld [vmem:[#allocation2 + $0x54] sm:$0xf]
        %v933 = vld [vmem:[#allocation2 + $0x58] sm:$0xf]
        %v934 = vld [vmem:[#allocation2 + $0x5c] sm:$0xf]
        %v935 = vld [vmem:[#allocation2 + $0x60] sm:$0xf]
        %v936 = vld [vmem:[#allocation2 + $0x64] sm:$0xf]
        %v937 = vld [vmem:[#allocation2 + $0x68] sm:$0xf]
        %v938 = vld [vmem:[#allocation2 + $0x6c] sm:$0xf]
        %v939 = vld [vmem:[#allocation2 + $0x70] sm:$0xf]
        %v940 = vld [vmem:[#allocation2 + $0x74] sm:$0xf]
        %v941 = vld [vmem:[#allocation2 + $0x78] sm:$0xf]
        %v942 = vld [vmem:[#allocation2 + $0x7c] sm:$0xf]
        %v943 = vld [vmem:[%s288] sm:$0xff]
        %v944 = vld [vmem:[%s288 + $0x8] sm:$0xff]
        %v945 = vld [vmem:[%s288 + $0x10] sm:$0xff]
        %v946 = vld [vmem:[%s288 + $0x18] sm:$0xff]
        %v947 = vld [vmem:[%s288 + $0x20] sm:$0xff]
        %v948 = vld [vmem:[%s288 + $0x28] sm:$0xff]
        %v949 = vld [vmem:[%s288 + $0x30] sm:$0xff]
        %v950 = vld [vmem:[%s288 + $0x38] sm:$0xff]
        %v951 = vld [vmem:[%s288 + $0x40] sm:$0xff]
        %v952 = vld [vmem:[%s288 + $0x48] sm:$0xff]
        %v953 = vld [vmem:[%s288 + $0x50] sm:$0xff]
        %v954 = vld [vmem:[%s288 + $0x58] sm:$0xff]
        %v955 = vld [vmem:[%s288 + $0x60] sm:$0xff]
        %v956 = vld [vmem:[%s288 + $0x68] sm:$0xff]
        %v957 = vld [vmem:[%s288 + $0x70] sm:$0xff]
        %v958 = vld [vmem:[%s288 + $0x78] sm:$0xff]
        %v975 = vunpack.c.l.b16 %v943
        %v976 = vunpack.c.h.b16 %v943
        %v977 = vunpack.c.l.b16 %v944
        %v978 = vunpack.c.h.b16 %v944
        %v979 = vunpack.c.l.b16 %v945
        %v980 = vunpack.c.h.b16 %v945
        %v981 = vunpack.c.l.b16 %v946
        %v982 = vunpack.c.h.b16 %v946
        %v983 = vunpack.c.l.b16 %v947
        %v984 = vunpack.c.h.b16 %v947
        %v985 = vunpack.c.l.b16 %v948
        %v986 = vunpack.c.h.b16 %v948
        %v987 = vunpack.c.l.b16 %v949
        %v988 = vunpack.c.h.b16 %v949
        %v989 = vunpack.c.l.b16 %v950
        %v990 = vunpack.c.h.b16 %v950
        %v991 = vunpack.c.l.b16 %v951
        %v992 = vunpack.c.h.b16 %v951
        %v993 = vunpack.c.l.b16 %v952
        %v994 = vunpack.c.h.b16 %v952
        %v995 = vunpack.c.l.b16 %v953
        %v996 = vunpack.c.h.b16 %v953
        %v997 = vunpack.c.l.b16 %v954
        %v998 = vunpack.c.h.b16 %v954
        %v999 = vunpack.c.l.b16 %v955
        %v1000 = vunpack.c.h.b16 %v955
        %v1001 = vunpack.c.l.b16 %v956
        %v1002 = vunpack.c.h.b16 %v956
        %v1003 = vunpack.c.l.b16 %v957
        %v1004 = vunpack.c.h.b16 %v957
        %v1005 = vunpack.c.l.b16 %v958
        %v1006 = vunpack.c.h.b16 %v958
        %v1007 = vpack.c.b16 %v977, %v975
        %v1008 = vpack.c.b16 %v978, %v976
        %v1009 = vpack.c.b16 %v981, %v979
        %v1010 = vpack.c.b16 %v982, %v980
        %v1011 = vpack.c.b16 %v985, %v983
        %v1012 = vpack.c.b16 %v986, %v984
        %v1013 = vpack.c.b16 %v989, %v987
        %v1014 = vpack.c.b16 %v990, %v988
        %v1015 = vpack.c.b16 %v993, %v991
        %v1016 = vpack.c.b16 %v994, %v992
        %v1017 = vpack.c.b16 %v997, %v995
        %v1018 = vpack.c.b16 %v998, %v996
        %v1019 = vpack.c.b16 %v1001, %v999
        %v1020 = vpack.c.b16 %v1002, %v1000
        %v1021 = vpack.c.b16 %v1005, %v1003
        %v1022 = vpack.c.b16 %v1006, %v1004
        %v1071 = vunpack.c.l.b16 %v911
        %v1072 = vunpack.c.l.b16 %v912
        %v1073 = vunpack.c.l.b16 %v913
        %v1074 = vunpack.c.l.b16 %v914
        %v1075 = vunpack.c.l.b16 %v915
        %v1076 = vunpack.c.l.b16 %v916
        %v1077 = vunpack.c.l.b16 %v917
        %v1078 = vunpack.c.l.b16 %v918
        %v1079 = vunpack.c.l.b16 %v919
        %v1080 = vunpack.c.l.b16 %v920
        %v1081 = vunpack.c.l.b16 %v921
        %v1082 = vunpack.c.l.b16 %v922
        %v1083 = vunpack.c.l.b16 %v923
        %v1084 = vunpack.c.l.b16 %v924
        %v1085 = vunpack.c.l.b16 %v925
        %v1086 = vunpack.c.l.b16 %v926
        %v1087 = vunpack.c.l.b16 %v927
        %v1088 = vunpack.c.l.b16 %v928
        %v1089 = vunpack.c.l.b16 %v929
        %v1090 = vunpack.c.l.b16 %v930
        %v1091 = vunpack.c.l.b16 %v931
        %v1092 = vunpack.c.l.b16 %v932
        %v1093 = vunpack.c.l.b16 %v933
        %v1094 = vunpack.c.l.b16 %v934
        %v1095 = vunpack.c.l.b16 %v935
        %v1096 = vunpack.c.l.b16 %v936
        %v1097 = vunpack.c.l.b16 %v937
        %v1098 = vunpack.c.l.b16 %v938
        %v1099 = vunpack.c.l.b16 %v939
        %v1100 = vunpack.c.l.b16 %v940
        %v1101 = vunpack.c.l.b16 %v941
        %v1102 = vunpack.c.l.b16 %v942
        %v1103 = vpack.c.b16 %v1072, %v1071
        %v1104 = vpack.c.b16 %v1074, %v1073
        %v1105 = vpack.c.b16 %v1076, %v1075
        %v1106 = vpack.c.b16 %v1078, %v1077
        %v1107 = vpack.c.b16 %v1080, %v1079
        %v1108 = vpack.c.b16 %v1082, %v1081
        %v1109 = vpack.c.b16 %v1084, %v1083
        %v1110 = vpack.c.b16 %v1086, %v1085
        %v1111 = vpack.c.b16 %v1088, %v1087
        %v1112 = vpack.c.b16 %v1090, %v1089
        %v1113 = vpack.c.b16 %v1092, %v1091
        %v1114 = vpack.c.b16 %v1094, %v1093
        %v1115 = vpack.c.b16 %v1096, %v1095
        %v1116 = vpack.c.b16 %v1098, %v1097
        %v1117 = vpack.c.b16 %v1100, %v1099
        %v1118 = vpack.c.b16 %v1102, %v1101
        %1135 = vmatprep.subr.bf16.mxu0 0
        %1136 = vmatpush1.bf16.msra.mxu0 %v1110
        %1137 = vmatprep.subr.bf16.mxu0 0
        %1138 = vmatpush1.bf16.msra.mxu0 %v1109
        %1139 = vmatprep.subr.bf16.mxu0 0
        %1140 = vmatpush1.bf16.msra.mxu0 %v1108
        %1141 = vmatprep.subr.bf16.mxu0 0
        %1142 = vmatpush1.bf16.msra.mxu0 %v1107
        %1143 = vmatprep.subr.bf16.mxu0 0
        %1144 = vmatpush1.bf16.msra.mxu0 %v1106
        %1145 = vmatprep.subr.bf16.mxu0 0
        %1146 = vmatpush1.bf16.msra.mxu0 %v1105
        %1147 = vmatprep.subr.bf16.mxu0 0
        %1148 = vmatpush1.bf16.msra.mxu0 %v1104
        %1149 = vmatprep.subr.bf16.mxu0 0
        %1150 = vmatpush1.bf16.msra.mxu0 %v1103
        %1151 = vmatprep.subr.bf16.mxu0 0
        %1152 = vmatpush2.bf16.msra.mxu0 %v1118
        %1153 = vmatprep.subr.bf16.mxu0 0
        %1154 = vmatpush2.bf16.msra.mxu0 %v1117
        %1155 = vmatprep.subr.bf16.mxu0 0
        %1156 = vmatpush2.bf16.msra.mxu0 %v1116
        %1157 = vmatprep.subr.bf16.mxu0 0
        %1158 = vmatpush2.bf16.msra.mxu0 %v1115
        %1159 = vmatprep.subr.bf16.mxu0 0
        %1160 = vmatpush2.bf16.msra.mxu0 %v1114
        %1161 = vmatprep.subr.bf16.mxu0 0
        %1162 = vmatpush2.bf16.msra.mxu0 %v1113
        %1163 = vmatprep.subr.bf16.mxu0 0
        %1164 = vmatpush2.bf16.msra.mxu0 %v1112
        %1165 = vmatprep.subr.bf16.mxu0 0
        %1166 = vmatpush2.bf16.msra.mxu0 %v1111
        %1167 = vmatprep.mubr.bf16.mxu0 %v1008
        %1168 = vmatmul.mubr.bf16.gmra.mxu0 %v1007
        %v1169 = vpop.f32.mrf.mxu0
        %v1170 = vadd.f32 0.0, %v1169
        %v1171 = vpop.f32.mrf.mxu0
        %v1172 = vpop.f32.mrf.mxu0
        %v1173 = vadd.f32 0.0, %v1172
        %v1174 = vpop.f32.mrf.mxu0
        %1175 = vmatprep.mubr.bf16.mxu0 %v1010
        %1176 = vmatmul.mubr.bf16.gmra.mxu0 %v1009
        %v1177 = vpop.f32.mrf.mxu0
        %v1178 = vadd.f32 0.0, %v1177
        %v1179 = vpop.f32.mrf.mxu0
        %v1180 = vpop.f32.mrf.mxu0
        %v1181 = vadd.f32 0.0, %v1180
        %v1182 = vpop.f32.mrf.mxu0
        %1183 = vmatprep.mubr.bf16.mxu0 %v1012
        %1184 = vmatmul.mubr.bf16.gmra.mxu0 %v1011
        %v1185 = vpop.f32.mrf.mxu0
        %v1186 = vadd.f32 0.0, %v1185
        %v1187 = vpop.f32.mrf.mxu0
        %v1188 = vpop.f32.mrf.mxu0
        %v1189 = vadd.f32 0.0, %v1188
        %v1190 = vpop.f32.mrf.mxu0
        %1191 = vmatprep.mubr.bf16.mxu0 %v1014
        %1192 = vmatmul.mubr.bf16.gmra.mxu0 %v1013
        %v1193 = vpop.f32.mrf.mxu0
        %v1194 = vadd.f32 0.0, %v1193
        %v1195 = vpop.f32.mrf.mxu0
        %v1196 = vpop.f32.mrf.mxu0
        %v1197 = vadd.f32 0.0, %v1196
        %v1198 = vpop.f32.mrf.mxu0
        %1199 = vmatprep.mubr.bf16.mxu0 %v1016
        %1200 = vmatmul.mubr.bf16.gmra.mxu0 %v1015
        %v1201 = vpop.f32.mrf.mxu0
        %v1202 = vadd.f32 0.0, %v1201
        %v1203 = vpop.f32.mrf.mxu0
        %v1204 = vpop.f32.mrf.mxu0
        %v1205 = vadd.f32 0.0, %v1204
        %v1206 = vpop.f32.mrf.mxu0
        %1207 = vmatprep.mubr.bf16.mxu0 %v1018
        %1208 = vmatmul.mubr.bf16.gmra.mxu0 %v1017
        %v1209 = vpop.f32.mrf.mxu0
        %v1210 = vadd.f32 0.0, %v1209
        %v1211 = vpop.f32.mrf.mxu0
        %v1212 = vpop.f32.mrf.mxu0
        %v1213 = vadd.f32 0.0, %v1212
        %v1214 = vpop.f32.mrf.mxu0
        %1215 = vmatprep.mubr.bf16.mxu0 %v1020
        %1216 = vmatmul.mubr.bf16.gmra.mxu0 %v1019
        %v1217 = vpop.f32.mrf.mxu0
        %v1218 = vadd.f32 0.0, %v1217
        %v1219 = vpop.f32.mrf.mxu0
        %v1220 = vpop.f32.mrf.mxu0
        %v1221 = vadd.f32 0.0, %v1220
        %v1222 = vpop.f32.mrf.mxu0
        %1223 = vmatprep.mubr.bf16.mxu0 %v1022
        %1224 = vmatmul.mubr.bf16.gmra.mxu0 %v1021
        %v1225 = vpop.f32.mrf.mxu0
        %v1226 = vadd.f32 0.0, %v1225
        %v1227 = vpop.f32.mrf.mxu0
        %v1228 = vpop.f32.mrf.mxu0
        %v1229 = vadd.f32 0.0, %v1228
        %v1230 = vpop.f32.mrf.mxu0
        %1231 = vdwg.mxu0
        %v1232 = vpack.c.bf16 %v1173, %v1170
        %v1233 = vpack.c.bf16 %v1181, %v1178
        %v1234 = vpack.c.bf16 %v1189, %v1186
        %v1235 = vpack.c.bf16 %v1197, %v1194
        %v1236 = vpack.c.bf16 %v1205, %v1202
        %v1237 = vpack.c.bf16 %v1213, %v1210
        %v1238 = vpack.c.bf16 %v1221, %v1218
        %v1239 = vpack.c.bf16 %v1229, %v1226
        %v1240 = vld [vmem:[%s294] sm:$0xf]
        %v1241 = vld [vmem:[%s294 + $0x4] sm:$0xf]
        %v1242 = vld [vmem:[%s294 + $0x8] sm:$0xf]
        %v1243 = vld [vmem:[%s294 + $0xc] sm:$0xf]
        %v1244 = vld [vmem:[%s294 + $0x10] sm:$0xf]
        %v1245 = vld [vmem:[%s294 + $0x14] sm:$0xf]
        %v1246 = vld [vmem:[%s294 + $0x18] sm:$0xf]
        %v1247 = vld [vmem:[%s294 + $0x1c] sm:$0xf]
        %v1248 = vld [vmem:[%s294 + $0x20] sm:$0xf]
        %v1249 = vld [vmem:[%s294 + $0x24] sm:$0xf]
        %v1250 = vld [vmem:[%s294 + $0x28] sm:$0xf]
        %v1251 = vld [vmem:[%s294 + $0x2c] sm:$0xf]
        %v1252 = vld [vmem:[%s294 + $0x30] sm:$0xf]
        %v1253 = vld [vmem:[%s294 + $0x34] sm:$0xf]
        %v1254 = vld [vmem:[%s294 + $0x38] sm:$0xf]
        %v1255 = vld [vmem:[%s294 + $0x3c] sm:$0xf]
        %v1256 = vld [vmem:[%s297] sm:$0x1]
        %v1258 = vlaneseq
        %v1259 = vshrl.u32 %v1258, 7
        %v1260 = vsub.s32 0, %v1259
        %v1261 = vrot.slane %v1256, %v1260
        %v1279 = vunpack.c.l.b16 %v1240
        %v1280 = vunpack.c.l.b16 %v1241
        %v1281 = vunpack.c.l.b16 %v1242
        %v1282 = vunpack.c.l.b16 %v1243
        %v1283 = vunpack.c.l.b16 %v1244
        %v1284 = vunpack.c.l.b16 %v1245
        %v1285 = vunpack.c.l.b16 %v1246
        %v1286 = vunpack.c.l.b16 %v1247
        %v1287 = vunpack.c.l.b16 %v1248
        %v1288 = vunpack.c.l.b16 %v1249
        %v1289 = vunpack.c.l.b16 %v1250
        %v1290 = vunpack.c.l.b16 %v1251
        %v1291 = vunpack.c.l.b16 %v1252
        %v1292 = vunpack.c.l.b16 %v1253
        %v1293 = vunpack.c.l.b16 %v1254
        %v1294 = vunpack.c.l.b16 %v1255
        %v1295 = vpack.c.b16 %v1280, %v1279
        %v1296 = vpack.c.b16 %v1282, %v1281
        %v1297 = vpack.c.b16 %v1284, %v1283
        %v1298 = vpack.c.b16 %v1286, %v1285
        %v1299 = vpack.c.b16 %v1288, %v1287
        %v1300 = vpack.c.b16 %v1290, %v1289
        %v1301 = vpack.c.b16 %v1292, %v1291
        %v1302 = vpack.c.b16 %v1294, %v1293
        %1311 = vmatprep.subr.bf16.mxu0 0
        %1312 = vmatpush1.bf16.msra.mxu0 %v1302
        %1313 = vmatprep.subr.bf16.mxu0 0
        %1314 = vmatpush1.bf16.msra.mxu0 %v1301
        %1315 = vmatprep.subr.bf16.mxu0 0
        %1316 = vmatpush1.bf16.msra.mxu0 %v1300
        %1317 = vmatprep.subr.bf16.mxu0 0
        %1318 = vmatpush1.bf16.msra.mxu0 %v1299
        %1319 = vmatprep.subr.bf16.mxu0 0
        %1320 = vmatpush1.bf16.msra.mxu0 %v1298
        %1321 = vmatprep.subr.bf16.mxu0 0
        %1322 = vmatpush1.bf16.msra.mxu0 %v1297
        %1323 = vmatprep.subr.bf16.mxu0 0
        %1324 = vmatpush1.bf16.msra.mxu0 %v1296
        %1325 = vmatprep.subr.bf16.mxu0 0
        %1326 = vmatpush1.bf16.msra.mxu0 %v1295
        %1327 = vmatprep.subr.bf16.mxu0 0
        %1328 = vmatpush2.bf16.msra.mxu0 0
        %1329 = vmatprep.subr.bf16.mxu0 0
        %1330 = vmatpush2.bf16.msra.mxu0 0
        %1331 = vmatprep.subr.bf16.mxu0 0
        %1332 = vmatpush2.bf16.msra.mxu0 0
        %1333 = vmatprep.subr.bf16.mxu0 0
        %1334 = vmatpush2.bf16.msra.mxu0 0
        %1335 = vmatprep.subr.bf16.mxu0 0
        %1336 = vmatpush2.bf16.msra.mxu0 0
        %1337 = vmatprep.subr.bf16.mxu0 0
        %1338 = vmatpush2.bf16.msra.mxu0 0
        %1339 = vmatprep.subr.bf16.mxu0 0
        %1340 = vmatpush2.bf16.msra.mxu0 0
        %1341 = vmatprep.subr.bf16.mxu0 0
        %1342 = vmatpush2.bf16.msra.mxu0 0
        %1343 = vmatprep.mubr.bf16.mxu0 0
        %1344 = vmatmul.mubr.bf16.gmra.mxu0 %v1232
        %v1345 = vpop.f32.mrf.mxu0
        %v1346 = vadd.f32 %v1261, %v1345
        %v1347 = vpop.f32.mrf.mxu0
        %v1348 = vpop.f32.mrf.mxu0
        %v1349 = vadd.f32 %v1261, %v1348
        %v1350 = vpop.f32.mrf.mxu0
        %1351 = vmatprep.mubr.bf16.mxu0 0
        %1352 = vmatmul.mubr.bf16.gmra.mxu0 %v1233
        %v1353 = vpop.f32.mrf.mxu0
        %v1354 = vadd.f32 %v1261, %v1353
        %v1355 = vpop.f32.mrf.mxu0
        %v1356 = vpop.f32.mrf.mxu0
        %v1357 = vadd.f32 %v1261, %v1356
        %v1358 = vpop.f32.mrf.mxu0
        %1359 = vmatprep.mubr.bf16.mxu0 0
        %1360 = vmatmul.mubr.bf16.gmra.mxu0 %v1234
        %v1361 = vpop.f32.mrf.mxu0
        %v1362 = vadd.f32 %v1261, %v1361
        %v1363 = vpop.f32.mrf.mxu0
        %v1364 = vpop.f32.mrf.mxu0
        %v1365 = vadd.f32 %v1261, %v1364
        %v1366 = vpop.f32.mrf.mxu0
        %1367 = vmatprep.mubr.bf16.mxu0 0
        %1368 = vmatmul.mubr.bf16.gmra.mxu0 %v1235
        %v1369 = vpop.f32.mrf.mxu0
        %v1370 = vadd.f32 %v1261, %v1369
        %v1371 = vpop.f32.mrf.mxu0
        %v1372 = vpop.f32.mrf.mxu0
        %v1373 = vadd.f32 %v1261, %v1372
        %v1374 = vpop.f32.mrf.mxu0
        %1375 = vmatprep.mubr.bf16.mxu0 0
        %1376 = vmatmul.mubr.bf16.gmra.mxu0 %v1236
        %v1377 = vpop.f32.mrf.mxu0
        %v1378 = vadd.f32 %v1261, %v1377
        %v1379 = vpop.f32.mrf.mxu0
        %v1380 = vpop.f32.mrf.mxu0
        %v1381 = vadd.f32 %v1261, %v1380
        %v1382 = vpop.f32.mrf.mxu0
        %1383 = vmatprep.mubr.bf16.mxu0 0
        %1384 = vmatmul.mubr.bf16.gmra.mxu0 %v1237
        %v1385 = vpop.f32.mrf.mxu0
        %v1386 = vadd.f32 %v1261, %v1385
        %v1387 = vpop.f32.mrf.mxu0
        %v1388 = vpop.f32.mrf.mxu0
        %v1389 = vadd.f32 %v1261, %v1388
        %v1390 = vpop.f32.mrf.mxu0
        %1391 = vmatprep.mubr.bf16.mxu0 0
        %1392 = vmatmul.mubr.bf16.gmra.mxu0 %v1238
        %v1393 = vpop.f32.mrf.mxu0
        %v1394 = vadd.f32 %v1261, %v1393
        %v1395 = vpop.f32.mrf.mxu0
        %v1396 = vpop.f32.mrf.mxu0
        %v1397 = vadd.f32 %v1261, %v1396
        %v1398 = vpop.f32.mrf.mxu0
        %1399 = vmatprep.mubr.bf16.mxu0 0
        %1400 = vmatmul.mubr.bf16.gmra.mxu0 %v1239
        %v1401 = vpop.f32.mrf.mxu0
        %v1402 = vadd.f32 %v1261, %v1401
        %v1403 = vpop.f32.mrf.mxu0
        %v1404 = vpop.f32.mrf.mxu0
        %v1405 = vadd.f32 %v1261, %v1404
        %v1406 = vpop.f32.mrf.mxu0
        %1407 = vdwg.mxu0
        %v1408 = vmax.f32 %v1346, 0.0
        %v1409 = vmax.f32 %v1349, 0.0
        %v1410 = vmax.f32 %v1354, 0.0
        %v1411 = vmax.f32 %v1357, 0.0
        %v1412 = vmax.f32 %v1362, 0.0
        %v1413 = vmax.f32 %v1365, 0.0
        %v1414 = vmax.f32 %v1370, 0.0
        %v1415 = vmax.f32 %v1373, 0.0
        %v1416 = vmax.f32 %v1378, 0.0
        %v1417 = vmax.f32 %v1381, 0.0
        %v1418 = vmax.f32 %v1386, 0.0
        %v1419 = vmax.f32 %v1389, 0.0
        %v1420 = vmax.f32 %v1394, 0.0
        %v1421 = vmax.f32 %v1397, 0.0
        %v1422 = vmax.f32 %v1402, 0.0
        %v1423 = vmax.f32 %v1405, 0.0
        %v1424 = vpack.c.bf16 %v1409, %v1408
        %v1425 = vpack.c.bf16 %v1411, %v1410
        %v1426 = vpack.c.bf16 %v1413, %v1412
        %v1427 = vpack.c.bf16 %v1415, %v1414
        %v1428 = vpack.c.bf16 %v1417, %v1416
        %v1429 = vpack.c.bf16 %v1419, %v1418
        %v1430 = vpack.c.bf16 %v1421, %v1420
        %v1431 = vpack.c.bf16 %v1423, %v1422
        %v1440 = vunpack.c.l.b16 %v1424
        %v1441 = vunpack.c.h.b16 %v1424
        %v1442 = vunpack.c.l.b16 %v1425
        %v1443 = vunpack.c.h.b16 %v1425
        %v1444 = vunpack.c.l.b16 %v1426
        %v1445 = vunpack.c.h.b16 %v1426
        %v1446 = vunpack.c.l.b16 %v1427
        %v1447 = vunpack.c.h.b16 %v1427
        %v1448 = vunpack.c.l.b16 %v1428
        %v1449 = vunpack.c.h.b16 %v1428
        %v1450 = vunpack.c.l.b16 %v1429
        %v1451 = vunpack.c.h.b16 %v1429
        %v1452 = vunpack.c.l.b16 %v1430
        %v1453 = vunpack.c.h.b16 %v1430
        %v1454 = vunpack.c.l.b16 %v1431
        %v1455 = vunpack.c.h.b16 %v1431
        %v1456 = vpack.c.b16 %v1440, %v1440
        %v1457 = vpack.c.b16 %v1441, %v1441
        %v1458 = vpack.c.b16 %v1442, %v1442
        %v1459 = vpack.c.b16 %v1443, %v1443
        %v1460 = vpack.c.b16 %v1444, %v1444
        %v1461 = vpack.c.b16 %v1445, %v1445
        %v1462 = vpack.c.b16 %v1446, %v1446
        %v1463 = vpack.c.b16 %v1447, %v1447
        %v1464 = vpack.c.b16 %v1448, %v1448
        %v1465 = vpack.c.b16 %v1449, %v1449
        %v1466 = vpack.c.b16 %v1450, %v1450
        %v1467 = vpack.c.b16 %v1451, %v1451
        %v1468 = vpack.c.b16 %v1452, %v1452
        %v1469 = vpack.c.b16 %v1453, %v1453
        %v1470 = vpack.c.b16 %v1454, %v1454
        %v1471 = vpack.c.b16 %v1455, %v1455
        %s1488 = sshra.s32 %s305, 3
        %s1489 = sand.u32 %s305, 7
        %s1490 = sadd.s32 %s1488, 32
        %s1491 = smul.addr %s1490, 4
        %s1492 = scalar_lea.vmem [#allocation2], %s1491
        %1493 = vst [vmem:[%s1492] sm:$0xf] %v1456
        %1494 = vst [vmem:[%s1492 + $0x4] sm:$0xf] %v1457
        %1495 = vst [vmem:[%s1492 + $0x8] sm:$0xf] %v1458
        %1496 = vst [vmem:[%s1492 + $0xc] sm:$0xf] %v1459
        %1497 = vst [vmem:[%s1492 + $0x10] sm:$0xf] %v1460
        %1498 = vst [vmem:[%s1492 + $0x14] sm:$0xf] %v1461
        %1499 = vst [vmem:[%s1492 + $0x18] sm:$0xf] %v1462
        %1500 = vst [vmem:[%s1492 + $0x1c] sm:$0xf] %v1463
        %1501 = vst [vmem:[%s1492 + $0x20] sm:$0xf] %v1464
        %1502 = vst [vmem:[%s1492 + $0x24] sm:$0xf] %v1465
        %1503 = vst [vmem:[%s1492 + $0x28] sm:$0xf] %v1466
        %1504 = vst [vmem:[%s1492 + $0x2c] sm:$0xf] %v1467
        %1505 = vst [vmem:[%s1492 + $0x30] sm:$0xf] %v1468
        %1506 = vst [vmem:[%s1492 + $0x34] sm:$0xf] %v1469
        %1507 = vst [vmem:[%s1492 + $0x38] sm:$0xf] %v1470
        %1508 = vst [vmem:[%s1492 + $0x3c] sm:$0xf] %v1471
      $region52: #{gcn_forward.1} parent=43 // pred_fallthru
        _
      %p1509 = scmp.eq.s32.totalorder %s21, 2
      // Predicated region
      $region53: #{gcn_forward.1} parent=43 // pred_check
        %p1510 = pneg %p1509
      $region54: #{gcn_forward.1} parent=43 // pred_check_branch
        %1512 = sbr.rel (%p1510) target = $region56
      $region55: #{gcn_forward.1} parent=43 // pred_region
        %s1513 = scalar_lea.vmem [#allocation2], 128
        %v1514 = vld [vmem:[%s1513] sm:$0xf]
        %v1515 = vld [vmem:[%s1513 + $0x4] sm:$0xf]
        %v1516 = vld [vmem:[%s1513 + $0x8] sm:$0xf]
        %v1517 = vld [vmem:[%s1513 + $0xc] sm:$0xf]
        %v1518 = vld [vmem:[%s1513 + $0x10] sm:$0xf]
        %v1519 = vld [vmem:[%s1513 + $0x14] sm:$0xf]
        %v1520 = vld [vmem:[%s1513 + $0x18] sm:$0xf]
        %v1521 = vld [vmem:[%s1513 + $0x1c] sm:$0xf]
        %v1522 = vld [vmem:[%s1513 + $0x20] sm:$0xf]
        %v1523 = vld [vmem:[%s1513 + $0x24] sm:$0xf]
        %v1524 = vld [vmem:[%s1513 + $0x28] sm:$0xf]
        %v1525 = vld [vmem:[%s1513 + $0x2c] sm:$0xf]
        %v1526 = vld [vmem:[%s1513 + $0x30] sm:$0xf]
        %v1527 = vld [vmem:[%s1513 + $0x34] sm:$0xf]
        %v1528 = vld [vmem:[%s1513 + $0x38] sm:$0xf]
        %v1529 = vld [vmem:[%s1513 + $0x3c] sm:$0xf]
        %v1530 = vld [vmem:[%s1513 + $0x40] sm:$0xf]
        %v1531 = vld [vmem:[%s1513 + $0x44] sm:$0xf]
        %v1532 = vld [vmem:[%s1513 + $0x48] sm:$0xf]
        %v1533 = vld [vmem:[%s1513 + $0x4c] sm:$0xf]
        %v1534 = vld [vmem:[%s1513 + $0x50] sm:$0xf]
        %v1535 = vld [vmem:[%s1513 + $0x54] sm:$0xf]
        %v1536 = vld [vmem:[%s1513 + $0x58] sm:$0xf]
        %v1537 = vld [vmem:[%s1513 + $0x5c] sm:$0xf]
        %v1538 = vld [vmem:[%s1513 + $0x60] sm:$0xf]
        %v1539 = vld [vmem:[%s1513 + $0x64] sm:$0xf]
        %v1540 = vld [vmem:[%s1513 + $0x68] sm:$0xf]
        %v1541 = vld [vmem:[%s1513 + $0x6c] sm:$0xf]
        %v1542 = vld [vmem:[%s1513 + $0x70] sm:$0xf]
        %v1543 = vld [vmem:[%s1513 + $0x74] sm:$0xf]
        %v1544 = vld [vmem:[%s1513 + $0x78] sm:$0xf]
        %v1545 = vld [vmem:[%s1513 + $0x7c] sm:$0xf]
        %v1546 = vld [vmem:[%s288] sm:$0xff]
        %v1547 = vld [vmem:[%s288 + $0x8] sm:$0xff]
        %v1548 = vld [vmem:[%s288 + $0x10] sm:$0xff]
        %v1549 = vld [vmem:[%s288 + $0x18] sm:$0xff]
        %v1550 = vld [vmem:[%s288 + $0x20] sm:$0xff]
        %v1551 = vld [vmem:[%s288 + $0x28] sm:$0xff]
        %v1552 = vld [vmem:[%s288 + $0x30] sm:$0xff]
        %v1553 = vld [vmem:[%s288 + $0x38] sm:$0xff]
        %v1554 = vld [vmem:[%s288 + $0x40] sm:$0xff]
        %v1555 = vld [vmem:[%s288 + $0x48] sm:$0xff]
        %v1556 = vld [vmem:[%s288 + $0x50] sm:$0xff]
        %v1557 = vld [vmem:[%s288 + $0x58] sm:$0xff]
        %v1558 = vld [vmem:[%s288 + $0x60] sm:$0xff]
        %v1559 = vld [vmem:[%s288 + $0x68] sm:$0xff]
        %v1560 = vld [vmem:[%s288 + $0x70] sm:$0xff]
        %v1561 = vld [vmem:[%s288 + $0x78] sm:$0xff]
        %v1578 = vunpack.c.l.b16 %v1546
        %v1579 = vunpack.c.h.b16 %v1546
        %v1580 = vunpack.c.l.b16 %v1547
        %v1581 = vunpack.c.h.b16 %v1547
        %v1582 = vunpack.c.l.b16 %v1548
        %v1583 = vunpack.c.h.b16 %v1548
        %v1584 = vunpack.c.l.b16 %v1549
        %v1585 = vunpack.c.h.b16 %v1549
        %v1586 = vunpack.c.l.b16 %v1550
        %v1587 = vunpack.c.h.b16 %v1550
        %v1588 = vunpack.c.l.b16 %v1551
        %v1589 = vunpack.c.h.b16 %v1551
        %v1590 = vunpack.c.l.b16 %v1552
        %v1591 = vunpack.c.h.b16 %v1552
        %v1592 = vunpack.c.l.b16 %v1553
        %v1593 = vunpack.c.h.b16 %v1553
        %v1594 = vunpack.c.l.b16 %v1554
        %v1595 = vunpack.c.h.b16 %v1554
        %v1596 = vunpack.c.l.b16 %v1555
        %v1597 = vunpack.c.h.b16 %v1555
        %v1598 = vunpack.c.l.b16 %v1556
        %v1599 = vunpack.c.h.b16 %v1556
        %v1600 = vunpack.c.l.b16 %v1557
        %v1601 = vunpack.c.h.b16 %v1557
        %v1602 = vunpack.c.l.b16 %v1558
        %v1603 = vunpack.c.h.b16 %v1558
        %v1604 = vunpack.c.l.b16 %v1559
        %v1605 = vunpack.c.h.b16 %v1559
        %v1606 = vunpack.c.l.b16 %v1560
        %v1607 = vunpack.c.h.b16 %v1560
        %v1608 = vunpack.c.l.b16 %v1561
        %v1609 = vunpack.c.h.b16 %v1561
        %v1610 = vpack.c.b16 %v1580, %v1578
        %v1611 = vpack.c.b16 %v1581, %v1579
        %v1612 = vpack.c.b16 %v1584, %v1582
        %v1613 = vpack.c.b16 %v1585, %v1583
        %v1614 = vpack.c.b16 %v1588, %v1586
        %v1615 = vpack.c.b16 %v1589, %v1587
        %v1616 = vpack.c.b16 %v1592, %v1590
        %v1617 = vpack.c.b16 %v1593, %v1591
        %v1618 = vpack.c.b16 %v1596, %v1594
        %v1619 = vpack.c.b16 %v1597, %v1595
        %v1620 = vpack.c.b16 %v1600, %v1598
        %v1621 = vpack.c.b16 %v1601, %v1599
        %v1622 = vpack.c.b16 %v1604, %v1602
        %v1623 = vpack.c.b16 %v1605, %v1603
        %v1624 = vpack.c.b16 %v1608, %v1606
        %v1625 = vpack.c.b16 %v1609, %v1607
        %v1674 = vunpack.c.l.b16 %v1514
        %v1675 = vunpack.c.l.b16 %v1515
        %v1676 = vunpack.c.l.b16 %v1516
        %v1677 = vunpack.c.l.b16 %v1517
        %v1678 = vunpack.c.l.b16 %v1518
        %v1679 = vunpack.c.l.b16 %v1519
        %v1680 = vunpack.c.l.b16 %v1520
        %v1681 = vunpack.c.l.b16 %v1521
        %v1682 = vunpack.c.l.b16 %v1522
        %v1683 = vunpack.c.l.b16 %v1523
        %v1684 = vunpack.c.l.b16 %v1524
        %v1685 = vunpack.c.l.b16 %v1525
        %v1686 = vunpack.c.l.b16 %v1526
        %v1687 = vunpack.c.l.b16 %v1527
        %v1688 = vunpack.c.l.b16 %v1528
        %v1689 = vunpack.c.l.b16 %v1529
        %v1690 = vunpack.c.l.b16 %v1530
        %v1691 = vunpack.c.l.b16 %v1531
        %v1692 = vunpack.c.l.b16 %v1532
        %v1693 = vunpack.c.l.b16 %v1533
        %v1694 = vunpack.c.l.b16 %v1534
        %v1695 = vunpack.c.l.b16 %v1535
        %v1696 = vunpack.c.l.b16 %v1536
        %v1697 = vunpack.c.l.b16 %v1537
        %v1698 = vunpack.c.l.b16 %v1538
        %v1699 = vunpack.c.l.b16 %v1539
        %v1700 = vunpack.c.l.b16 %v1540
        %v1701 = vunpack.c.l.b16 %v1541
        %v1702 = vunpack.c.l.b16 %v1542
        %v1703 = vunpack.c.l.b16 %v1543
        %v1704 = vunpack.c.l.b16 %v1544
        %v1705 = vunpack.c.l.b16 %v1545
        %v1706 = vpack.c.b16 %v1675, %v1674
        %v1707 = vpack.c.b16 %v1677, %v1676
        %v1708 = vpack.c.b16 %v1679, %v1678
        %v1709 = vpack.c.b16 %v1681, %v1680
        %v1710 = vpack.c.b16 %v1683, %v1682
        %v1711 = vpack.c.b16 %v1685, %v1684
        %v1712 = vpack.c.b16 %v1687, %v1686
        %v1713 = vpack.c.b16 %v1689, %v1688
        %v1714 = vpack.c.b16 %v1691, %v1690
        %v1715 = vpack.c.b16 %v1693, %v1692
        %v1716 = vpack.c.b16 %v1695, %v1694
        %v1717 = vpack.c.b16 %v1697, %v1696
        %v1718 = vpack.c.b16 %v1699, %v1698
        %v1719 = vpack.c.b16 %v1701, %v1700
        %v1720 = vpack.c.b16 %v1703, %v1702
        %v1721 = vpack.c.b16 %v1705, %v1704
        %1738 = vmatprep.subr.bf16.mxu0 0
        %1739 = vmatpush1.bf16.msra.mxu0 %v1713
        %1740 = vmatprep.subr.bf16.mxu0 0
        %1741 = vmatpush1.bf16.msra.mxu0 %v1712
        %1742 = vmatprep.subr.bf16.mxu0 0
        %1743 = vmatpush1.bf16.msra.mxu0 %v1711
        %1744 = vmatprep.subr.bf16.mxu0 0
        %1745 = vmatpush1.bf16.msra.mxu0 %v1710
        %1746 = vmatprep.subr.bf16.mxu0 0
        %1747 = vmatpush1.bf16.msra.mxu0 %v1709
        %1748 = vmatprep.subr.bf16.mxu0 0
        %1749 = vmatpush1.bf16.msra.mxu0 %v1708
        %1750 = vmatprep.subr.bf16.mxu0 0
        %1751 = vmatpush1.bf16.msra.mxu0 %v1707
        %1752 = vmatprep.subr.bf16.mxu0 0
        %1753 = vmatpush1.bf16.msra.mxu0 %v1706
        %1754 = vmatprep.subr.bf16.mxu0 0
        %1755 = vmatpush2.bf16.msra.mxu0 %v1721
        %1756 = vmatprep.subr.bf16.mxu0 0
        %1757 = vmatpush2.bf16.msra.mxu0 %v1720
        %1758 = vmatprep.subr.bf16.mxu0 0
        %1759 = vmatpush2.bf16.msra.mxu0 %v1719
        %1760 = vmatprep.subr.bf16.mxu0 0
        %1761 = vmatpush2.bf16.msra.mxu0 %v1718
        %1762 = vmatprep.subr.bf16.mxu0 0
        %1763 = vmatpush2.bf16.msra.mxu0 %v1717
        %1764 = vmatprep.subr.bf16.mxu0 0
        %1765 = vmatpush2.bf16.msra.mxu0 %v1716
        %1766 = vmatprep.subr.bf16.mxu0 0
        %1767 = vmatpush2.bf16.msra.mxu0 %v1715
        %1768 = vmatprep.subr.bf16.mxu0 0
        %1769 = vmatpush2.bf16.msra.mxu0 %v1714
        %1770 = vmatprep.mubr.bf16.mxu0 %v1611
        %1771 = vmatmul.mubr.bf16.gmra.mxu0 %v1610
        %v1772 = vpop.f32.mrf.mxu0
        %v1773 = vadd.f32 0.0, %v1772
        %v1774 = vpop.f32.mrf.mxu0
        %v1775 = vpop.f32.mrf.mxu0
        %v1776 = vadd.f32 0.0, %v1775
        %v1777 = vpop.f32.mrf.mxu0
        %1778 = vmatprep.mubr.bf16.mxu0 %v1613
        %1779 = vmatmul.mubr.bf16.gmra.mxu0 %v1612
        %v1780 = vpop.f32.mrf.mxu0
        %v1781 = vadd.f32 0.0, %v1780
        %v1782 = vpop.f32.mrf.mxu0
        %v1783 = vpop.f32.mrf.mxu0
        %v1784 = vadd.f32 0.0, %v1783
        %v1785 = vpop.f32.mrf.mxu0
        %1786 = vmatprep.mubr.bf16.mxu0 %v1615
        %1787 = vmatmul.mubr.bf16.gmra.mxu0 %v1614
        %v1788 = vpop.f32.mrf.mxu0
        %v1789 = vadd.f32 0.0, %v1788
        %v1790 = vpop.f32.mrf.mxu0
        %v1791 = vpop.f32.mrf.mxu0
        %v1792 = vadd.f32 0.0, %v1791
        %v1793 = vpop.f32.mrf.mxu0
        %1794 = vmatprep.mubr.bf16.mxu0 %v1617
        %1795 = vmatmul.mubr.bf16.gmra.mxu0 %v1616
        %v1796 = vpop.f32.mrf.mxu0
        %v1797 = vadd.f32 0.0, %v1796
        %v1798 = vpop.f32.mrf.mxu0
        %v1799 = vpop.f32.mrf.mxu0
        %v1800 = vadd.f32 0.0, %v1799
        %v1801 = vpop.f32.mrf.mxu0
        %1802 = vmatprep.mubr.bf16.mxu0 %v1619
        %1803 = vmatmul.mubr.bf16.gmra.mxu0 %v1618
        %v1804 = vpop.f32.mrf.mxu0
        %v1805 = vadd.f32 0.0, %v1804
        %v1806 = vpop.f32.mrf.mxu0
        %v1807 = vpop.f32.mrf.mxu0
        %v1808 = vadd.f32 0.0, %v1807
        %v1809 = vpop.f32.mrf.mxu0
        %1810 = vmatprep.mubr.bf16.mxu0 %v1621
        %1811 = vmatmul.mubr.bf16.gmra.mxu0 %v1620
        %v1812 = vpop.f32.mrf.mxu0
        %v1813 = vadd.f32 0.0, %v1812
        %v1814 = vpop.f32.mrf.mxu0
        %v1815 = vpop.f32.mrf.mxu0
        %v1816 = vadd.f32 0.0, %v1815
        %v1817 = vpop.f32.mrf.mxu0
        %1818 = vmatprep.mubr.bf16.mxu0 %v1623
        %1819 = vmatmul.mubr.bf16.gmra.mxu0 %v1622
        %v1820 = vpop.f32.mrf.mxu0
        %v1821 = vadd.f32 0.0, %v1820
        %v1822 = vpop.f32.mrf.mxu0
        %v1823 = vpop.f32.mrf.mxu0
        %v1824 = vadd.f32 0.0, %v1823
        %v1825 = vpop.f32.mrf.mxu0
        %1826 = vmatprep.mubr.bf16.mxu0 %v1625
        %1827 = vmatmul.mubr.bf16.gmra.mxu0 %v1624
        %v1828 = vpop.f32.mrf.mxu0
        %v1829 = vadd.f32 0.0, %v1828
        %v1830 = vpop.f32.mrf.mxu0
        %v1831 = vpop.f32.mrf.mxu0
        %v1832 = vadd.f32 0.0, %v1831
        %v1833 = vpop.f32.mrf.mxu0
        %1834 = vdwg.mxu0
        %v1835 = vpack.c.bf16 %v1776, %v1773
        %v1836 = vpack.c.bf16 %v1784, %v1781
        %v1837 = vpack.c.bf16 %v1792, %v1789
        %v1838 = vpack.c.bf16 %v1800, %v1797
        %v1839 = vpack.c.bf16 %v1808, %v1805
        %v1840 = vpack.c.bf16 %v1816, %v1813
        %v1841 = vpack.c.bf16 %v1824, %v1821
        %v1842 = vpack.c.bf16 %v1832, %v1829
        %v1843 = vld [vmem:[%s294] sm:$0xf]
        %v1844 = vld [vmem:[%s294 + $0x4] sm:$0xf]
        %v1845 = vld [vmem:[%s294 + $0x8] sm:$0xf]
        %v1846 = vld [vmem:[%s294 + $0xc] sm:$0xf]
        %v1847 = vld [vmem:[%s294 + $0x10] sm:$0xf]
        %v1848 = vld [vmem:[%s294 + $0x14] sm:$0xf]
        %v1849 = vld [vmem:[%s294 + $0x18] sm:$0xf]
        %v1850 = vld [vmem:[%s294 + $0x1c] sm:$0xf]
        %v1851 = vld [vmem:[%s294 + $0x20] sm:$0xf]
        %v1852 = vld [vmem:[%s294 + $0x24] sm:$0xf]
        %v1853 = vld [vmem:[%s294 + $0x28] sm:$0xf]
        %v1854 = vld [vmem:[%s294 + $0x2c] sm:$0xf]
        %v1855 = vld [vmem:[%s294 + $0x30] sm:$0xf]
        %v1856 = vld [vmem:[%s294 + $0x34] sm:$0xf]
        %v1857 = vld [vmem:[%s294 + $0x38] sm:$0xf]
        %v1858 = vld [vmem:[%s294 + $0x3c] sm:$0xf]
        %v1859 = vld [vmem:[%s297] sm:$0x1]
        %v1861 = vlaneseq
        %v1862 = vshrl.u32 %v1861, 7
        %v1863 = vsub.s32 0, %v1862
        %v1864 = vrot.slane %v1859, %v1863
        %v1882 = vunpack.c.l.b16 %v1843
        %v1883 = vunpack.c.l.b16 %v1844
        %v1884 = vunpack.c.l.b16 %v1845
        %v1885 = vunpack.c.l.b16 %v1846
        %v1886 = vunpack.c.l.b16 %v1847
        %v1887 = vunpack.c.l.b16 %v1848
        %v1888 = vunpack.c.l.b16 %v1849
        %v1889 = vunpack.c.l.b16 %v1850
        %v1890 = vunpack.c.l.b16 %v1851
        %v1891 = vunpack.c.l.b16 %v1852
        %v1892 = vunpack.c.l.b16 %v1853
        %v1893 = vunpack.c.l.b16 %v1854
        %v1894 = vunpack.c.l.b16 %v1855
        %v1895 = vunpack.c.l.b16 %v1856
        %v1896 = vunpack.c.l.b16 %v1857
        %v1897 = vunpack.c.l.b16 %v1858
        %v1898 = vpack.c.b16 %v1883, %v1882
        %v1899 = vpack.c.b16 %v1885, %v1884
        %v1900 = vpack.c.b16 %v1887, %v1886
        %v1901 = vpack.c.b16 %v1889, %v1888
        %v1902 = vpack.c.b16 %v1891, %v1890
        %v1903 = vpack.c.b16 %v1893, %v1892
        %v1904 = vpack.c.b16 %v1895, %v1894
        %v1905 = vpack.c.b16 %v1897, %v1896
        %1914 = vmatprep.subr.bf16.mxu0 0
        %1915 = vmatpush1.bf16.msra.mxu0 %v1905
        %1916 = vmatprep.subr.bf16.mxu0 0
        %1917 = vmatpush1.bf16.msra.mxu0 %v1904
        %1918 = vmatprep.subr.bf16.mxu0 0
        %1919 = vmatpush1.bf16.msra.mxu0 %v1903
        %1920 = vmatprep.subr.bf16.mxu0 0
        %1921 = vmatpush1.bf16.msra.mxu0 %v1902
        %1922 = vmatprep.subr.bf16.mxu0 0
        %1923 = vmatpush1.bf16.msra.mxu0 %v1901
        %1924 = vmatprep.subr.bf16.mxu0 0
        %1925 = vmatpush1.bf16.msra.mxu0 %v1900
        %1926 = vmatprep.subr.bf16.mxu0 0
        %1927 = vmatpush1.bf16.msra.mxu0 %v1899
        %1928 = vmatprep.subr.bf16.mxu0 0
        %1929 = vmatpush1.bf16.msra.mxu0 %v1898
        %1930 = vmatprep.subr.bf16.mxu0 0
        %1931 = vmatpush2.bf16.msra.mxu0 0
        %1932 = vmatprep.subr.bf16.mxu0 0
        %1933 = vmatpush2.bf16.msra.mxu0 0
        %1934 = vmatprep.subr.bf16.mxu0 0
        %1935 = vmatpush2.bf16.msra.mxu0 0
        %1936 = vmatprep.subr.bf16.mxu0 0
        %1937 = vmatpush2.bf16.msra.mxu0 0
        %1938 = vmatprep.subr.bf16.mxu0 0
        %1939 = vmatpush2.bf16.msra.mxu0 0
        %1940 = vmatprep.subr.bf16.mxu0 0
        %1941 = vmatpush2.bf16.msra.mxu0 0
        %1942 = vmatprep.subr.bf16.mxu0 0
        %1943 = vmatpush2.bf16.msra.mxu0 0
        %1944 = vmatprep.subr.bf16.mxu0 0
        %1945 = vmatpush2.bf16.msra.mxu0 0
        %1946 = vmatprep.mubr.bf16.mxu0 0
        %1947 = vmatmul.mubr.bf16.gmra.mxu0 %v1835
        %v1948 = vpop.f32.mrf.mxu0
        %v1949 = vadd.f32 %v1864, %v1948
        %v1950 = vpop.f32.mrf.mxu0
        %v1951 = vpop.f32.mrf.mxu0
        %v1952 = vadd.f32 %v1864, %v1951
        %v1953 = vpop.f32.mrf.mxu0
        %1954 = vmatprep.mubr.bf16.mxu0 0
        %1955 = vmatmul.mubr.bf16.gmra.mxu0 %v1836
        %v1956 = vpop.f32.mrf.mxu0
        %v1957 = vadd.f32 %v1864, %v1956
        %v1958 = vpop.f32.mrf.mxu0
        %v1959 = vpop.f32.mrf.mxu0
        %v1960 = vadd.f32 %v1864, %v1959
        %v1961 = vpop.f32.mrf.mxu0
        %1962 = vmatprep.mubr.bf16.mxu0 0
        %1963 = vmatmul.mubr.bf16.gmra.mxu0 %v1837
        %v1964 = vpop.f32.mrf.mxu0
        %v1965 = vadd.f32 %v1864, %v1964
        %v1966 = vpop.f32.mrf.mxu0
        %v1967 = vpop.f32.mrf.mxu0
        %v1968 = vadd.f32 %v1864, %v1967
        %v1969 = vpop.f32.mrf.mxu0
        %1970 = vmatprep.mubr.bf16.mxu0 0
        %1971 = vmatmul.mubr.bf16.gmra.mxu0 %v1838
        %v1972 = vpop.f32.mrf.mxu0
        %v1973 = vadd.f32 %v1864, %v1972
        %v1974 = vpop.f32.mrf.mxu0
        %v1975 = vpop.f32.mrf.mxu0
        %v1976 = vadd.f32 %v1864, %v1975
        %v1977 = vpop.f32.mrf.mxu0
        %1978 = vmatprep.mubr.bf16.mxu0 0
        %1979 = vmatmul.mubr.bf16.gmra.mxu0 %v1839
        %v1980 = vpop.f32.mrf.mxu0
        %v1981 = vadd.f32 %v1864, %v1980
        %v1982 = vpop.f32.mrf.mxu0
        %v1983 = vpop.f32.mrf.mxu0
        %v1984 = vadd.f32 %v1864, %v1983
        %v1985 = vpop.f32.mrf.mxu0
        %1986 = vmatprep.mubr.bf16.mxu0 0
        %1987 = vmatmul.mubr.bf16.gmra.mxu0 %v1840
        %v1988 = vpop.f32.mrf.mxu0
        %v1989 = vadd.f32 %v1864, %v1988
        %v1990 = vpop.f32.mrf.mxu0
        %v1991 = vpop.f32.mrf.mxu0
        %v1992 = vadd.f32 %v1864, %v1991
        %v1993 = vpop.f32.mrf.mxu0
        %1994 = vmatprep.mubr.bf16.mxu0 0
        %1995 = vmatmul.mubr.bf16.gmra.mxu0 %v1841
        %v1996 = vpop.f32.mrf.mxu0
        %v1997 = vadd.f32 %v1864, %v1996
        %v1998 = vpop.f32.mrf.mxu0
        %v1999 = vpop.f32.mrf.mxu0
        %v2000 = vadd.f32 %v1864, %v1999
        %v2001 = vpop.f32.mrf.mxu0
        %2002 = vmatprep.mubr.bf16.mxu0 0
        %2003 = vmatmul.mubr.bf16.gmra.mxu0 %v1842
        %v2004 = vpop.f32.mrf.mxu0
        %v2005 = vadd.f32 %v1864, %v2004
        %v2006 = vpop.f32.mrf.mxu0
        %v2007 = vpop.f32.mrf.mxu0
        %v2008 = vadd.f32 %v1864, %v2007
        %v2009 = vpop.f32.mrf.mxu0
        %2010 = vdwg.mxu0
        %v2011 = vmax.f32 %v1949, 0.0
        %v2012 = vmax.f32 %v1952, 0.0
        %v2013 = vmax.f32 %v1957, 0.0
        %v2014 = vmax.f32 %v1960, 0.0
        %v2015 = vmax.f32 %v1965, 0.0
        %v2016 = vmax.f32 %v1968, 0.0
        %v2017 = vmax.f32 %v1973, 0.0
        %v2018 = vmax.f32 %v1976, 0.0
        %v2019 = vmax.f32 %v1981, 0.0
        %v2020 = vmax.f32 %v1984, 0.0
        %v2021 = vmax.f32 %v1989, 0.0
        %v2022 = vmax.f32 %v1992, 0.0
        %v2023 = vmax.f32 %v1997, 0.0
        %v2024 = vmax.f32 %v2000, 0.0
        %v2025 = vmax.f32 %v2005, 0.0
        %v2026 = vmax.f32 %v2008, 0.0
        %v2027 = vpack.c.bf16 %v2012, %v2011
        %v2028 = vpack.c.bf16 %v2014, %v2013
        %v2029 = vpack.c.bf16 %v2016, %v2015
        %v2030 = vpack.c.bf16 %v2018, %v2017
        %v2031 = vpack.c.bf16 %v2020, %v2019
        %v2032 = vpack.c.bf16 %v2022, %v2021
        %v2033 = vpack.c.bf16 %v2024, %v2023
        %v2034 = vpack.c.bf16 %v2026, %v2025
        %v2035 = vld [vmem:[%s4] sm:$0xf]
        %v2036 = vld [vmem:[%s4 + $0x4] sm:$0xf]
        %v2037 = vld [vmem:[%s4 + $0x8] sm:$0xf]
        %v2038 = vld [vmem:[%s4 + $0xc] sm:$0xf]
        %v2039 = vld [vmem:[%s4 + $0x10] sm:$0xf]
        %v2040 = vld [vmem:[%s4 + $0x14] sm:$0xf]
        %v2041 = vld [vmem:[%s4 + $0x18] sm:$0xf]
        %v2042 = vld [vmem:[%s4 + $0x1c] sm:$0xf]
        %v2043 = vld [vmem:[%s4 + $0x20] sm:$0xf]
        %v2044 = vld [vmem:[%s4 + $0x24] sm:$0xf]
        %v2045 = vld [vmem:[%s4 + $0x28] sm:$0xf]
        %v2046 = vld [vmem:[%s4 + $0x2c] sm:$0xf]
        %v2047 = vld [vmem:[%s4 + $0x30] sm:$0xf]
        %v2048 = vld [vmem:[%s4 + $0x34] sm:$0xf]
        %v2049 = vld [vmem:[%s4 + $0x38] sm:$0xf]
        %v2050 = vld [vmem:[%s4 + $0x3c] sm:$0xf]
        %v2051 = vld [vmem:[%s5] sm:$0x1]
        %v2053 = vlaneseq
        %v2054 = vshrl.u32 %v2053, 7
        %v2055 = vsub.s32 0, %v2054
        %v2056 = vrot.slane %v2051, %v2055
        %v2074 = vunpack.c.l.b16 %v2035
        %v2075 = vunpack.c.l.b16 %v2036
        %v2076 = vunpack.c.l.b16 %v2037
        %v2077 = vunpack.c.l.b16 %v2038
        %v2078 = vunpack.c.l.b16 %v2039
        %v2079 = vunpack.c.l.b16 %v2040
        %v2080 = vunpack.c.l.b16 %v2041
        %v2081 = vunpack.c.l.b16 %v2042
        %v2082 = vunpack.c.l.b16 %v2043
        %v2083 = vunpack.c.l.b16 %v2044
        %v2084 = vunpack.c.l.b16 %v2045
        %v2085 = vunpack.c.l.b16 %v2046
        %v2086 = vunpack.c.l.b16 %v2047
        %v2087 = vunpack.c.l.b16 %v2048
        %v2088 = vunpack.c.l.b16 %v2049
        %v2089 = vunpack.c.l.b16 %v2050
        %v2090 = vpack.c.b16 %v2075, %v2074
        %v2091 = vpack.c.b16 %v2077, %v2076
        %v2092 = vpack.c.b16 %v2079, %v2078
        %v2093 = vpack.c.b16 %v2081, %v2080
        %v2094 = vpack.c.b16 %v2083, %v2082
        %v2095 = vpack.c.b16 %v2085, %v2084
        %v2096 = vpack.c.b16 %v2087, %v2086
        %v2097 = vpack.c.b16 %v2089, %v2088
        %2106 = vmatprep.subr.bf16.mxu0 0
        %2107 = vmatpush1.bf16.msra.mxu0 %v2097
        %2108 = vmatprep.subr.bf16.mxu0 0
        %2109 = vmatpush1.bf16.msra.mxu0 %v2096
        %2110 = vmatprep.subr.bf16.mxu0 0
        %2111 = vmatpush1.bf16.msra.mxu0 %v2095
        %2112 = vmatprep.subr.bf16.mxu0 0
        %2113 = vmatpush1.bf16.msra.mxu0 %v2094
        %2114 = vmatprep.subr.bf16.mxu0 0
        %2115 = vmatpush1.bf16.msra.mxu0 %v2093
        %2116 = vmatprep.subr.bf16.mxu0 0
        %2117 = vmatpush1.bf16.msra.mxu0 %v2092
        %2118 = vmatprep.subr.bf16.mxu0 0
        %2119 = vmatpush1.bf16.msra.mxu0 %v2091
        %2120 = vmatprep.subr.bf16.mxu0 0
        %2121 = vmatpush1.bf16.msra.mxu0 %v2090
        %2122 = vmatprep.subr.bf16.mxu0 0
        %2123 = vmatpush2.bf16.msra.mxu0 0
        %2124 = vmatprep.subr.bf16.mxu0 0
        %2125 = vmatpush2.bf16.msra.mxu0 0
        %2126 = vmatprep.subr.bf16.mxu0 0
        %2127 = vmatpush2.bf16.msra.mxu0 0
        %2128 = vmatprep.subr.bf16.mxu0 0
        %2129 = vmatpush2.bf16.msra.mxu0 0
        %2130 = vmatprep.subr.bf16.mxu0 0
        %2131 = vmatpush2.bf16.msra.mxu0 0
        %2132 = vmatprep.subr.bf16.mxu0 0
        %2133 = vmatpush2.bf16.msra.mxu0 0
        %2134 = vmatprep.subr.bf16.mxu0 0
        %2135 = vmatpush2.bf16.msra.mxu0 0
        %2136 = vmatprep.subr.bf16.mxu0 0
        %2137 = vmatpush2.bf16.msra.mxu0 0
        %2138 = vmatprep.mubr.bf16.mxu0 0
        %2139 = vmatmul.mubr.bf16.gmra.mxu0 %v2027
        %v2140 = vpop.f32.mrf.mxu0
        %v2141 = vadd.f32 %v2056, %v2140
        %v2142 = vpop.f32.mrf.mxu0
        %v2143 = vpop.f32.mrf.mxu0
        %v2144 = vadd.f32 %v2056, %v2143
        %v2145 = vpop.f32.mrf.mxu0
        %2146 = vmatprep.mubr.bf16.mxu0 0
        %2147 = vmatmul.mubr.bf16.gmra.mxu0 %v2028
        %v2148 = vpop.f32.mrf.mxu0
        %v2149 = vadd.f32 %v2056, %v2148
        %v2150 = vpop.f32.mrf.mxu0
        %v2151 = vpop.f32.mrf.mxu0
        %v2152 = vadd.f32 %v2056, %v2151
        %v2153 = vpop.f32.mrf.mxu0
        %2154 = vmatprep.mubr.bf16.mxu0 0
        %2155 = vmatmul.mubr.bf16.gmra.mxu0 %v2029
        %v2156 = vpop.f32.mrf.mxu0
        %v2157 = vadd.f32 %v2056, %v2156
        %v2158 = vpop.f32.mrf.mxu0
        %v2159 = vpop.f32.mrf.mxu0
        %v2160 = vadd.f32 %v2056, %v2159
        %v2161 = vpop.f32.mrf.mxu0
        %2162 = vmatprep.mubr.bf16.mxu0 0
        %2163 = vmatmul.mubr.bf16.gmra.mxu0 %v2030
        %v2164 = vpop.f32.mrf.mxu0
        %v2165 = vadd.f32 %v2056, %v2164
        %v2166 = vpop.f32.mrf.mxu0
        %v2167 = vpop.f32.mrf.mxu0
        %v2168 = vadd.f32 %v2056, %v2167
        %v2169 = vpop.f32.mrf.mxu0
        %2170 = vmatprep.mubr.bf16.mxu0 0
        %2171 = vmatmul.mubr.bf16.gmra.mxu0 %v2031
        %v2172 = vpop.f32.mrf.mxu0
        %v2173 = vadd.f32 %v2056, %v2172
        %v2174 = vpop.f32.mrf.mxu0
        %v2175 = vpop.f32.mrf.mxu0
        %v2176 = vadd.f32 %v2056, %v2175
        %v2177 = vpop.f32.mrf.mxu0
        %2178 = vmatprep.mubr.bf16.mxu0 0
        %2179 = vmatmul.mubr.bf16.gmra.mxu0 %v2032
        %v2180 = vpop.f32.mrf.mxu0
        %v2181 = vadd.f32 %v2056, %v2180
        %v2182 = vpop.f32.mrf.mxu0
        %v2183 = vpop.f32.mrf.mxu0
        %v2184 = vadd.f32 %v2056, %v2183
        %v2185 = vpop.f32.mrf.mxu0
        %2186 = vmatprep.mubr.bf16.mxu0 0
        %2187 = vmatmul.mubr.bf16.gmra.mxu0 %v2033
        %v2188 = vpop.f32.mrf.mxu0
        %v2189 = vadd.f32 %v2056, %v2188
        %v2190 = vpop.f32.mrf.mxu0
        %v2191 = vpop.f32.mrf.mxu0
        %v2192 = vadd.f32 %v2056, %v2191
        %v2193 = vpop.f32.mrf.mxu0
        %2194 = vmatprep.mubr.bf16.mxu0 0
        %2195 = vmatmul.mubr.bf16.gmra.mxu0 %v2034
        %v2196 = vpop.f32.mrf.mxu0
        %v2197 = vadd.f32 %v2056, %v2196
        %v2198 = vpop.f32.mrf.mxu0
        %v2199 = vpop.f32.mrf.mxu0
        %v2200 = vadd.f32 %v2056, %v2199
        %v2201 = vpop.f32.mrf.mxu0
        %2202 = vdwg.mxu0
        %2203 = vmax.xlane.f32.xlu0 %v2141
        %v2204 = vpop.xlane.xlu0 %2203
        %2205 = vmax.xlane.f32.xlu0 %v2144
        %v2206 = vpop.xlane.xlu0 %2205
        %2207 = vmax.xlane.f32.xlu0 %v2149
        %v2208 = vpop.xlane.xlu0 %2207
        %2209 = vmax.xlane.f32.xlu0 %v2152
        %v2210 = vpop.xlane.xlu0 %2209
        %2211 = vmax.xlane.f32.xlu0 %v2157
        %v2212 = vpop.xlane.xlu0 %2211
        %2213 = vmax.xlane.f32.xlu0 %v2160
        %v2214 = vpop.xlane.xlu0 %2213
        %2215 = vmax.xlane.f32.xlu0 %v2165
        %v2216 = vpop.xlane.xlu0 %2215
        %2217 = vmax.xlane.f32.xlu0 %v2168
        %v2218 = vpop.xlane.xlu0 %2217
        %2219 = vmax.xlane.f32.xlu0 %v2173
        %v2220 = vpop.xlane.xlu0 %2219
        %2221 = vmax.xlane.f32.xlu0 %v2176
        %v2222 = vpop.xlane.xlu0 %2221
        %2223 = vmax.xlane.f32.xlu0 %v2181
        %v2224 = vpop.xlane.xlu0 %2223
        %2225 = vmax.xlane.f32.xlu0 %v2184
        %v2226 = vpop.xlane.xlu0 %2225
        %2227 = vmax.xlane.f32.xlu0 %v2189
        %v2228 = vpop.xlane.xlu0 %2227
        %2229 = vmax.xlane.f32.xlu0 %v2192
        %v2230 = vpop.xlane.xlu0 %2229
        %2231 = vmax.xlane.f32.xlu0 %v2197
        %v2232 = vpop.xlane.xlu0 %2231
        %2233 = vmax.xlane.f32.xlu0 %v2200
        %v2234 = vpop.xlane.xlu0 %2233
        %v2235 = vsub.f32 %v2141, %v2204
        %v2236 = vsub.f32 %v2144, %v2206
        %v2237 = vsub.f32 %v2149, %v2208
        %v2238 = vsub.f32 %v2152, %v2210
        %v2239 = vsub.f32 %v2157, %v2212
        %v2240 = vsub.f32 %v2160, %v2214
        %v2241 = vsub.f32 %v2165, %v2216
        %v2242 = vsub.f32 %v2168, %v2218
        %v2243 = vsub.f32 %v2173, %v2220
        %v2244 = vsub.f32 %v2176, %v2222
        %v2245 = vsub.f32 %v2181, %v2224
        %v2246 = vsub.f32 %v2184, %v2226
        %v2247 = vsub.f32 %v2189, %v2228
        %v2248 = vsub.f32 %v2192, %v2230
        %v2249 = vsub.f32 %v2197, %v2232
        %v2250 = vsub.f32 %v2200, %v2234
        %v2251 = vmul.f32 %v2235, 1.442695
        %v2252 = vpow.pop %v2251
        %v2253 = vmul.f32 %v2236, 1.442695
        %v2254 = vpow.pop %v2253
        %v2255 = vmul.f32 %v2237, 1.442695
        %v2256 = vpow.pop %v2255
        %v2257 = vmul.f32 %v2238, 1.442695
        %v2258 = vpow.pop %v2257
        %v2259 = vmul.f32 %v2239, 1.442695
        %v2260 = vpow.pop %v2259
        %v2261 = vmul.f32 %v2240, 1.442695
        %v2262 = vpow.pop %v2261
        %v2263 = vmul.f32 %v2241, 1.442695
        %v2264 = vpow.pop %v2263
        %v2265 = vmul.f32 %v2242, 1.442695
        %v2266 = vpow.pop %v2265
        %v2267 = vmul.f32 %v2243, 1.442695
        %v2268 = vpow.pop %v2267
        %v2269 = vmul.f32 %v2244, 1.442695
        %v2270 = vpow.pop %v2269
        %v2271 = vmul.f32 %v2245, 1.442695
        %v2272 = vpow.pop %v2271
        %v2273 = vmul.f32 %v2246, 1.442695
        %v2274 = vpow.pop %v2273
        %v2275 = vmul.f32 %v2247, 1.442695
        %v2276 = vpow.pop %v2275
        %v2277 = vmul.f32 %v2248, 1.442695
        %v2278 = vpow.pop %v2277
        %v2279 = vmul.f32 %v2249, 1.442695
        %v2280 = vpow.pop %v2279
        %v2281 = vmul.f32 %v2250, 1.442695
        %v2282 = vpow.pop %v2281
        %2283 = vadd.xlane.f32.xlu0 %v2252
        %v2284 = vpop.xlane.xlu0 %2283
        %2285 = vadd.xlane.f32.xlu0 %v2254
        %v2286 = vpop.xlane.xlu0 %2285
        %2287 = vadd.xlane.f32.xlu0 %v2256
        %v2288 = vpop.xlane.xlu0 %2287
        %2289 = vadd.xlane.f32.xlu0 %v2258
        %v2290 = vpop.xlane.xlu0 %2289
        %2291 = vadd.xlane.f32.xlu0 %v2260
        %v2292 = vpop.xlane.xlu0 %2291
        %2293 = vadd.xlane.f32.xlu0 %v2262
        %v2294 = vpop.xlane.xlu0 %2293
        %2295 = vadd.xlane.f32.xlu0 %v2264
        %v2296 = vpop.xlane.xlu0 %2295
        %2297 = vadd.xlane.f32.xlu0 %v2266
        %v2298 = vpop.xlane.xlu0 %2297
        %2299 = vadd.xlane.f32.xlu0 %v2268
        %v2300 = vpop.xlane.xlu0 %2299
        %2301 = vadd.xlane.f32.xlu0 %v2270
        %v2302 = vpop.xlane.xlu0 %2301
        %2303 = vadd.xlane.f32.xlu0 %v2272
        %v2304 = vpop.xlane.xlu0 %2303
        %2305 = vadd.xlane.f32.xlu0 %v2274
        %v2306 = vpop.xlane.xlu0 %2305
        %2307 = vadd.xlane.f32.xlu0 %v2276
        %v2308 = vpop.xlane.xlu0 %2307
        %2309 = vadd.xlane.f32.xlu0 %v2278
        %v2310 = vpop.xlane.xlu0 %2309
        %2311 = vadd.xlane.f32.xlu0 %v2280
        %v2312 = vpop.xlane.xlu0 %2311
        %2313 = vadd.xlane.f32.xlu0 %v2282
        %v2314 = vpop.xlane.xlu0 %2313
        %v2315 = vlog2.pop %v2284
        %v2316 = vmul.f32 %v2315, 0.6931472
        %v2317 = vlog2.pop %v2286
        %v2318 = vmul.f32 %v2317, 0.6931472
        %v2319 = vlog2.pop %v2288
        %v2320 = vmul.f32 %v2319, 0.6931472
        %v2321 = vlog2.pop %v2290
        %v2322 = vmul.f32 %v2321, 0.6931472
        %v2323 = vlog2.pop %v2292
        %v2324 = vmul.f32 %v2323, 0.6931472
        %v2325 = vlog2.pop %v2294
        %v2326 = vmul.f32 %v2325, 0.6931472
        %v2327 = vlog2.pop %v2296
        %v2328 = vmul.f32 %v2327, 0.6931472
        %v2329 = vlog2.pop %v2298
        %v2330 = vmul.f32 %v2329, 0.6931472
        %v2331 = vlog2.pop %v2300
        %v2332 = vmul.f32 %v2331, 0.6931472
        %v2333 = vlog2.pop %v2302
        %v2334 = vmul.f32 %v2333, 0.6931472
        %v2335 = vlog2.pop %v2304
        %v2336 = vmul.f32 %v2335, 0.6931472
        %v2337 = vlog2.pop %v2306
        %v2338 = vmul.f32 %v2337, 0.6931472
        %v2339 = vlog2.pop %v2308
        %v2340 = vmul.f32 %v2339, 0.6931472
        %v2341 = vlog2.pop %v2310
        %v2342 = vmul.f32 %v2341, 0.6931472
        %v2343 = vlog2.pop %v2312
        %v2344 = vmul.f32 %v2343, 0.6931472
        %v2345 = vlog2.pop %v2314
        %v2346 = vmul.f32 %v2345, 0.6931472
        %v2347 = vsub.f32 %v2235, %v2316
        %v2348 = vsub.f32 %v2236, %v2318
        %v2349 = vsub.f32 %v2237, %v2320
        %v2350 = vsub.f32 %v2238, %v2322
        %v2351 = vsub.f32 %v2239, %v2324
        %v2352 = vsub.f32 %v2240, %v2326
        %v2353 = vsub.f32 %v2241, %v2328
        %v2354 = vsub.f32 %v2242, %v2330
        %v2355 = vsub.f32 %v2243, %v2332
        %v2356 = vsub.f32 %v2244, %v2334
        %v2357 = vsub.f32 %v2245, %v2336
        %v2358 = vsub.f32 %v2246, %v2338
        %v2359 = vsub.f32 %v2247, %v2340
        %v2360 = vsub.f32 %v2248, %v2342
        %v2361 = vsub.f32 %v2249, %v2344
        %v2362 = vsub.f32 %v2250, %v2346
        %2363 = vst [vmem:[%s302] sm:$0xff] %v2347
        %2364 = vst [vmem:[%s302 + $0x8] sm:$0xff] %v2348
        %2365 = vst [vmem:[%s302 + $0x10] sm:$0xff] %v2349
        %2366 = vst [vmem:[%s302 + $0x18] sm:$0xff] %v2350
        %2367 = vst [vmem:[%s302 + $0x20] sm:$0xff] %v2351
        %2368 = vst [vmem:[%s302 + $0x28] sm:$0xff] %v2352
        %2369 = vst [vmem:[%s302 + $0x30] sm:$0xff] %v2353
        %2370 = vst [vmem:[%s302 + $0x38] sm:$0xff] %v2354
        %2371 = vst [vmem:[%s302 + $0x40] sm:$0xff] %v2355
        %2372 = vst [vmem:[%s302 + $0x48] sm:$0xff] %v2356
        %2373 = vst [vmem:[%s302 + $0x50] sm:$0xff] %v2357
        %2374 = vst [vmem:[%s302 + $0x58] sm:$0xff] %v2358
        %2375 = vst [vmem:[%s302 + $0x60] sm:$0xff] %v2359
        %2376 = vst [vmem:[%s302 + $0x68] sm:$0xff] %v2360
        %2377 = vst [vmem:[%s302 + $0x70] sm:$0xff] %v2361
        %2378 = vst [vmem:[%s302 + $0x78] sm:$0xff] %v2362
      $region56: #{gcn_forward.1} parent=43 // pred_fallthru
        _
      %s2379 = smul.u32 16, %s22
      %p2380 = scmp.lt.s32.totalorder %s2379, 31
      %s2381 = scalar_select %p2380, %s2379, 31
      %s2382 = smul.addr %s2381, 8
      %s2383 = scalar_lea.vmem %s6, %s2382
      // Predicated region
      $region57: #{gcn_forward.1} parent=43 // pred_check
        %p2384 = pneg %p188
      $region58: #{gcn_forward.1} parent=43 // pred_check_branch
        %2386 = sbr.rel (%p2384) target = $region60
      $region59: #{gcn_forward.1} parent=43 // pred_region
        %s2387 = smul.u32 16, %s22
      $region60: #{gcn_forward.1} parent=43 // pred_fallthru
        _
    $region44: #{gcn_forward.1} parent=5 // pred_fallthru
      _
    %p2388 = scmp.le.s32.totalorder 2, %s12
    // Predicated region
    $region61: #{gcn_forward.1} parent=5 // pred_check
      %p2389 = pneg %p2388
    $region62: #{gcn_forward.1} parent=5 // pred_check_branch
      %2391 = sbr.rel (%p2389) target = $region64
    $region63: #{gcn_forward.1} parent=5 // pred_region
      %s2392 = ssub.s32 %s12, 2
      // Predicated region
      $region65: #{gcn_forward.1} parent=63 // pred_check
        %p2393 = pneg %p194
      $region66: #{gcn_forward.1} parent=63 // pred_check_branch
        %2395 = sbr.rel (%p2393) target = $region68
      $region67: #{gcn_forward.1} parent=63 // pred_region
        %s2396 = smul.u32 16, %s24
        %p2397 = scmp.lt.s32.totalorder %s2396, 31
        %s2398 = scalar_select %p2397, %s2396, 31
        %s2399 = smul.addr %s2398, 8
        %s2400 = scalar_lea.vmem %s6, %s2399
      $region68: #{gcn_forward.1} parent=63 // pred_fallthru
        _
    $region64: #{gcn_forward.1} parent=5 // pred_fallthru
      _
  $region6: #{gcn_forward.1} parent=0 // loop_footer
    %s16 = sadd.s32 1, %s12
  $region7: #{gcn_forward.1} parent=0 // loop_footer_branch
    %11 = sbr.rel target = $region3
  $region8: #{gcn_forward.1} parent=0 // loop_exit
    _

</llo_original>
